<compile_context>
chip_gen: v6e
topology: v6e:2x2x1
jax: 0.10.0
libtpu: 0.0.40
codegen_flags: <defaults>
</compile_context>

<pallas_src>
import jax
import jax.numpy as jnp
from jax.experimental import pallas as pl
from jax.experimental.pallas import tpu as pltpu


# ---------------------------------------------------------------------------
# Packed-buffer row offsets (all multiples of 8 so every in-kernel slice is
# sublane-aligned).
# ---------------------------------------------------------------------------
# w32 slab: [744, 32] f32
_W32_BERT2 = 0      # bert_nn2                                        [256, 32]
_W32_ABIL2 = 256    # abilities_nn2                                   [256, 32]
_W32_PFUSE = 512    # fused pokemon small heads -> p_features_nn1     [104, 32]
_W32_A3P   = 616    # abilities_nn3 @ p_features_nn1[8:12]            [ 32, 32]
_W32_MFUSE = 648    # fused move small heads -> m_features_nn1        [ 32, 32]
_W32_B3P   = 680    # bert_nn3 (lane-padded 4 -> 32)                  [ 32, 32]
_W32_M1B   = 712    # m_features_nn1[0:4] (row-padded 4 -> 32)        [ 32, 32]
_W32_ROWS  = 744

# w64 slab: [448, 64] f32
_W64_P2 = 0         # p_features_nn2                                  [ 32, 64]
_W64_P3 = 32        # p_features_nn3                                  [ 64, 64]
_W64_M2 = 96        # m_features_nn2                                  [ 32, 64]
_W64_M3 = 128       # m_features_nn3                                  [ 64, 64]
_W64_N1 = 192       # nn1                                             [128, 64]
_W64_N2 = 320       # nn2 (lane-padded 16 -> 64)                      [ 64, 64]
_W64_N3 = 384       # nn3 (rows 16->64, lanes 1->64, zero padded)     [ 64, 64]
_W64_ROWS = 448

# bias table: [16, 256] f32, one bias per row (zero-padded on the right).
(_B_B1, _B_B2, _B_B3, _B_A1, _B_A2, _B_PF, _B_P2, _B_P3,
 _B_MF, _B_M2, _B_M3, _B_N1, _B_N2, _B_N3) = range(14)


# ---------------------------------------------------------------------------
# Kernel
# ---------------------------------------------------------------------------
def poke_move_kernel(desc_ref, abil_ref, psm_ref, msm_ref,
                     wb1_ref, wa1_ref, w32_ref, w64_ref, bias_ref, out_ref):
    relu = lambda v: jnp.maximum(v, 0.0)
    dot = lambda x, w: jnp.dot(x, w, preferred_element_type=jnp.float32)
    bias = lambda row, n: bias_ref[row:row + 1, 0:n]            # [1, n]

    # --- description head: 768 -> 256 -> 32 -> (4, lane-padded to 32) ------
    xb = relu(dot(desc_ref[...].astype(jnp.bfloat16), wb1_ref[...]) + bias(_B_B1, 256))
    xb = relu(dot(xb, w32_ref[_W32_BERT2:_W32_BERT2 + 256, :]) + bias(_B_B2, 32))
    bert_out = relu(dot(xb, w32_ref[_W32_B3P:_W32_B3P + 32, :]) + bias(_B_B3, 32))
    # bert_out lanes 4:32 are exactly zero by construction of the padded weights.

    # --- abilities head: 837 -> 256 -> 32 (abilities_nn3 folded downstream) -
    xa = relu(dot(abil_ref[...].astype(jnp.bfloat16), wa1_ref[...]) + bias(_B_A1, 256))
    xa = relu(dot(xa, w32_ref[_W32_ABIL2:_W32_ABIL2 + 256, :]) + bias(_B_A2, 32))

    # --- pokemon branch (fused small heads + p_features_nn1/2/3) -----------
    f = relu(dot(psm_ref[...], w32_ref[_W32_PFUSE:_W32_PFUSE + 104, :])
             + dot(xa, w32_ref[_W32_A3P:_W32_A3P + 32, :])
             + bias(_B_PF, 32))
    f = relu(dot(f, w64_ref[_W64_P2:_W64_P2 + 32, :]) + bias(_B_P2, 64))
    pokemon_out = dot(f, w64_ref[_W64_P3:_W64_P3 + 64, :]) + bias(_B_P3, 64)

    # --- move branch (fused small heads + m_features_nn1/2/3) --------------
    g = relu(dot(msm_ref[...], w32_ref[_W32_MFUSE:_W32_MFUSE + 32, :])
             + dot(bert_out, w32_ref[_W32_M1B:_W32_M1B + 32, :])
             + bias(_B_MF, 32))
    g = relu(dot(g, w64_ref[_W64_M2:_W64_M2 + 32, :]) + bias(_B_M2, 64))
    move_out = dot(g, w64_ref[_W64_M3:_W64_M3 + 64, :]) + bias(_B_M3, 64)

    # --- final head: nn1 over concat via split-weight sum, nn2, nn3, sigmoid
    h = relu(dot(pokemon_out, w64_ref[_W64_N1:_W64_N1 + 64, :])
             + dot(move_out, w64_ref[_W64_N1 + 64:_W64_N1 + 128, :])
             + bias(_B_N1, 64))
    h = relu(dot(h, w64_ref[_W64_N2:_W64_N2 + 64, :]) + bias(_B_N2, 64))   # lanes 16:64 == 0
    h = dot(h, w64_ref[_W64_N3:_W64_N3 + 64, :]) + bias(_B_N3, 64)          # lane 0 = logit
    out_ref[...] = jax.nn.sigmoid(h[:, 0:1])


# ---------------------------------------------------------------------------
# Parameter construction (deterministic, PyTorch-style uniform init).
# ---------------------------------------------------------------------------
_LAYER_DIMS = [
    ("bert_nn1", 768, 256), ("bert_nn2", 256, 32), ("bert_nn3", 32, 4),
    ("types_nn", 36, 4), ("egg_groups_nn", 30, 4),
    ("abilities_nn1", 279 * 3, 256), ("abilities_nn2", 256, 32), ("abilities_nn3", 32, 4),
    ("colors_nn", 10, 4), ("shapes_nn", 14, 4),
    ("p_features_nn1", 32, 32), ("p_features_nn2", 32, 64), ("p_features_nn3", 64, 64),
    ("type_nn", 18, 4), ("damage_class_nn", 3, 1),
    ("m_features_nn1", 14, 32), ("m_features_nn2", 32, 64), ("m_features_nn3", 64, 64),
    ("nn1", 128, 64), ("nn2", 64, 16), ("nn3", 16, 1),
]


def init_params(key):
    params = {}
    for name, fan_in, fan_out in _LAYER_DIMS:
        key, kw, kb = jax.random.split(key, 3)
        bound = 1.0 / jnp.sqrt(jnp.float32(fan_in))
        w = jax.random.uniform(kw, (fan_in, fan_out), jnp.float32, -bound, bound)
        b = jax.random.uniform(kb, (1, fan_out), jnp.float32, -bound, bound)
        params[name] = (w, b)
    return params


def pack_params(params):
    """Pack per-layer (W [in,out], b [1,out]) params into 5 kernel buffers."""
    w = lambda n: params[n][0]
    b = lambda n: params[n][1]
    wp1, bp1 = params["p_features_nn1"]     # [32, 32], [1, 32]
    wm1, bm1 = params["m_features_nn1"]     # [14, 32], [1, 32]

    # Fused pokemon small heads; rows follow the p_small concat layout
    # [types(36), egg(30), color(10), shape(14), other(12), pad(2)].
    w_pf = jnp.concatenate([
        w("types_nn") @ wp1[0:4],
        w("egg_groups_nn") @ wp1[4:8],
        w("colors_nn") @ wp1[12:16],
        w("shapes_nn") @ wp1[16:20],
        wp1[20:32],
        jnp.zeros((2, 32), jnp.float32),
    ], axis=0)                                                    # [104, 32]
    b_pf = (bp1
            + b("types_nn") @ wp1[0:4] + b("egg_groups_nn") @ wp1[4:8]
            + b("colors_nn") @ wp1[12:16] + b("shapes_nn") @ wp1[16:20]
            + b("abilities_nn3") @ wp1[8:12])                     # [1, 32]
    w_a3p = w("abilities_nn3") @ wp1[8:12]                        # [32, 32]

    # Fused move small heads; rows follow [type(18), dmg(3), other(5), pad(6)].
    w_mf = jnp.concatenate([
        w("type_nn") @ wm1[4:8],
        w("damage_class_nn") @ wm1[8:9],
        wm1[9:14],
        jnp.zeros((6, 32), jnp.float32),
    ], axis=0)                                                    # [32, 32]
    b_mf = bm1 + b("type_nn") @ wm1[4:8] + b("damage_class_nn") @ wm1[8:9]

    w_b3p = jnp.pad(w("bert_nn3"), ((0, 0), (0, 28)))             # [32, 32]
    b_b3p = jnp.pad(b("bert_nn3"), ((0, 0), (0, 28)))             # [1, 32]
    w_m1b = jnp.pad(wm1[0:4], ((0, 28), (0, 0)))                  # [32, 32]

    w_n2p = jnp.pad(w("nn2"), ((0, 0), (0, 48)))                  # [64, 64]
    b_n2p = jnp.pad(b("nn2"), ((0, 0), (0, 48)))                  # [1, 64]
    w_n3p = jnp.pad(w("nn3"), ((0, 48), (0, 63)))                 # [64, 64]
    b_n3p = jnp.pad(b("nn3"), ((0, 0), (0, 63)))                  # [1, 64]

    w32 = jnp.concatenate([w("bert_nn2"), w("abilities_nn2"), w_pf, w_a3p,
                           w_mf, w_b3p, w_m1b], axis=0)
    assert w32.shape == (_W32_ROWS, 32), w32.shape

    w64 = jnp.concatenate([w("p_features_nn2"), w("p_features_nn3"),
                           w("m_features_nn2"), w("m_features_nn3"),
                           w("nn1"), w_n2p, w_n3p], axis=0)
    assert w64.shape == (_W64_ROWS, 64), w64.shape

    rows = [b("bert_nn1"), b("bert_nn2"), b_b3p, b("abilities_nn1"),
            b("abilities_nn2"), b_pf, b("p_features_nn2"), b("p_features_nn3"),
            b_mf, b("m_features_nn2"), b("m_features_nn3"), b("nn1"),
            b_n2p, b_n3p,
            jnp.zeros((1, 1), jnp.float32), jnp.zeros((1, 1), jnp.float32)]
    bias = jnp.concatenate(
        [jnp.pad(r, ((0, 0), (0, 256 - r.shape[1]))) for r in rows], axis=0)
    assert bias.shape == (16, 256), bias.shape

    return {
        "w_b1": w("bert_nn1").astype(jnp.bfloat16),       # [768, 256] bf16
        "w_a1": w("abilities_nn1").astype(jnp.bfloat16),  # [837, 256] bf16
        "w32": w32,
        "w64": w64,
        "bias": bias,
    }


# ---------------------------------------------------------------------------
# Wrapper
# ---------------------------------------------------------------------------
def _round_up(x, m):
    return ((x + m - 1) // m) * m


def poke_move_encoder(inputs, packed, *, max_tile=256):
    """inputs: dict of [B, feat] float32 arrays. Returns [B] sigmoid scores."""
    B = inputs["desc"].shape[0]
    desc = inputs["desc"]                          # [B, 768]
    abil = inputs["p_abil"]                        # [B, 837]
    zcols = lambda n: jnp.zeros((B, n), jnp.float32)
    p_small = jnp.concatenate([inputs["p_types"], inputs["p_egg"], inputs["p_color"],
                               inputs["p_shape"], inputs["p_other"], zcols(2)], axis=1)   # [B, 104]
    m_small = jnp.concatenate([inputs["m_type"], inputs["m_dmg"], inputs["m_other"],
                               zcols(6)], axis=1)                                         # [B, 32]

    # Batch tile: 256 fills the MXU M dim on v6e/v7x (>=128 on v5e); small
    # batches run as a single full-array block.
    TB = max_tile if B >= max_tile else _round_up(B, 8)
    B_pad = _round_up(B, TB)
    if B_pad != B:
        padr = lambda x: jnp.pad(x, ((0, B_pad - B), (0, 0)))
        desc, abil, p_small, m_small = map(padr, (desc, abil, p_small, m_small))

    data = [desc, abil, p_small, m_small]
    weights = [packed["w_b1"], packed["w_a1"], packed["w32"], packed["w64"], packed["bias"]]

    data_specs = [pl.BlockSpec((TB, a.shape[1]), lambda i: (i, 0)) for a in data]
    # Constant index_map: weight blocks are not re-fetched across batch tiles.
    weight_specs = [pl.BlockSpec(a.shape, lambda i: (0, 0)) for a in weights]

    out = pl.pallas_call(
        poke_move_kernel,
        out_shape=jax.ShapeDtypeStruct((B_pad, 1), jnp.float32),
        grid=(B_pad // TB,),
        in_specs=data_specs + weight_specs,
        out_specs=pl.BlockSpec((TB, 1), lambda i: (i, 0)),
        compiler_params=pltpu.CompilerParams(
            dimension_semantics=("parallel",)),
    )(*data, *weights)
    return out[:B, 0]                               # .view(-1)


# ---------------------------------------------------------------------------
# Pure-JAX reference (mirrors the PyTorch forward, with concatenation).
# big_dtype lets us build a bf16-matched variant of the two wide layers.
# ---------------------------------------------------------------------------
def reference_forward(inputs, params, big_dtype=jnp.float32):
    def lin(name, x, big=False):
        w, b = params[name]
        if big:
            return jnp.dot(x.astype(big_dtype), w.astype(big_dtype),
                           preferred_element_type=jnp.float32) + b
        return x @ w + b

    relu = lambda x: jnp.maximum(x, 0.0)

    bert = relu(lin("bert_nn3", relu(lin("bert_nn2",
           relu(lin("bert_nn1", inputs["desc"], big=True))))))
    types_o = lin("types_nn", inputs["p_types"])
    egg_o = lin("egg_groups_nn", inputs["p_egg"])
    abil = lin("abilities_nn3", relu(lin("abilities_nn2",
           relu(lin("abilities_nn1", inputs["p_abil"], big=True)))))
    color_o = lin("colors_nn", inputs["p_color"])
    shape_o = lin("shapes_nn", inputs["p_shape"])
    feats = jnp.concatenate([types_o, egg_o, abil, color_o, shape_o, inputs["p_other"]], axis=1)
    pokemon = lin("p_features_nn3", relu(lin("p_features_nn2", relu(lin("p_features_nn1", feats)))))

    type_o = lin("type_nn", inputs["m_type"])
    dmg_o = lin("damage_class_nn", inputs["m_dmg"])
    feats = jnp.concatenate([bert, type_o, dmg_o, inputs["m_other"]], axis=1)
    move = lin("m_features_nn3", relu(lin("m_features_nn2", relu(lin("m_features_nn1", feats)))))

    feats = jnp.concatenate([pokemon, move], axis=1)
    out = lin("nn3", relu(lin("nn2", relu(lin("nn1", feats)))))
    return jax.nn.sigmoid(out).reshape(-1)


if __name__ == "__main__":
    key = jax.random.PRNGKey(0)
    key, pkey = jax.random.split(key)
    params = init_params(pkey)
    packed = pack_params(params)

    B = 8
    shapes = {
        "desc": (B, 768),        # stand-in for ConvBERT CLS embedding
        "p_types": (B, 36),
        "p_egg": (B, 30),
        "p_abil": (B, 279 * 3),
        "p_color": (B, 10),
        "p_shape": (B, 14),
        "p_other": (B, 12),      # 4*5 + 12 = 32 for p_features_nn1
        "m_type": (B, 18),
        "m_dmg": (B, 3),
        "m_other": (B, 5),       # 4 + 4 + 1 + 5 = 14 for m_features_nn1
    }
    inputs = {}
    for name, shp in shapes.items():
        key, sub = jax.random.split(key)
        inputs[name] = jax.random.normal(sub, shp, jnp.float32)

    out = jax.block_until_ready(poke_move_encoder(inputs, packed))
    ref_bf16 = jax.block_until_ready(reference_forward(inputs, params, big_dtype=jnp.bfloat16))
    ref_f32 = jax.block_until_ready(reference_forward(inputs, params, big_dtype=jnp.float32))

    assert out.shape == (B,), out.shape
    # Matched-precision check (same bf16 cast on the two wide layers): tight.
    assert jnp.allclose(out, ref_bf16, atol=2e-3, rtol=2e-3), (out, ref_bf16)
    # Full-f32 reference: loose tolerance accounts for bf16 weights.
    assert jnp.allclose(out, ref_f32, atol=3e-2, rtol=3e-2), (out, ref_f32)
    print("KERNEL_OK")
</pallas_src>

<mosaic_0001>
module attributes {stable_mosaic.version = 11 : i64} {
  func.func @poke_move_kernel(%arg0: i32, %arg1: memref<8x768xf32, #tpu.memory_space<vmem>>, %arg2: memref<8x837xf32, #tpu.memory_space<vmem>>, %arg3: memref<8x104xf32, #tpu.memory_space<vmem>>, %arg4: memref<8x32xf32, #tpu.memory_space<vmem>>, %arg5: memref<768x256xbf16, #tpu.memory_space<vmem>>, %arg6: memref<837x256xbf16, #tpu.memory_space<vmem>>, %arg7: memref<744x32xf32, #tpu.memory_space<vmem>>, %arg8: memref<448x64xf32, #tpu.memory_space<vmem>>, %arg9: memref<16x256xf32, #tpu.memory_space<vmem>>, %arg10: memref<8x1xf32, #tpu.memory_space<vmem>>) attributes {dimension_semantics = [#tpu.dimension_semantics<parallel>], iteration_bounds = array<i64: 1>, scalar_prefetch = 0 : i64, scratch_operands = 0 : i64, tpu.core_type = #tpu.core_type<tc>, window_params = [{transform_indices = @transform_0, window_bounds = array<i64: 8, 768>}, {transform_indices = @transform_1, window_bounds = array<i64: 8, 837>}, {transform_indices = @transform_2, window_bounds = array<i64: 8, 104>}, {transform_indices = @transform_3, window_bounds = array<i64: 8, 32>}, {pipeline_mode = #tpu.pipeline_mode<synchronous>, transform_indices = @transform_4, window_bounds = array<i64: 768, 256>}, {pipeline_mode = #tpu.pipeline_mode<synchronous>, transform_indices = @transform_5, window_bounds = array<i64: 837, 256>}, {pipeline_mode = #tpu.pipeline_mode<synchronous>, transform_indices = @transform_6, window_bounds = array<i64: 744, 32>}, {pipeline_mode = #tpu.pipeline_mode<synchronous>, transform_indices = @transform_7, window_bounds = array<i64: 448, 64>}, {pipeline_mode = #tpu.pipeline_mode<synchronous>, transform_indices = @transform_8, window_bounds = array<i64: 16, 256>}, {transform_indices = @transform_9, window_bounds = array<i64: 8, 1>}]} {
    %c0 = arith.constant 0 : index
    %c0_0 = arith.constant 0 : index
    %0 = vector.load %arg1[%c0, %c0_0] : memref<8x768xf32, #tpu.memory_space<vmem>>, vector<8x768xf32>
    %1 = arith.truncf %0 : vector<8x768xf32> to vector<8x768xbf16>
    %c0_1 = arith.constant 0 : index
    %c0_2 = arith.constant 0 : index
    %2 = vector.load %arg5[%c0_1, %c0_2] : memref<768x256xbf16, #tpu.memory_space<vmem>>, vector<768x256xbf16>
    %cst = arith.constant dense<0.000000e+00> : vector<8x256xf32>
    %3 = tpu.matmul %1, %2, %cst {dimension_numbers = #tpu.dot_dimension_numbers<[1], [0], [0], [1], [0, 0, 1, 1], [], []>} : vector<8x768xbf16>, vector<768x256xbf16>, vector<8x256xf32> -> vector<8x256xf32>
    %c0_3 = arith.constant 0 : index
    %c0_4 = arith.constant 0 : index
    %4 = vector.load %arg9[%c0_3, %c0_4] : memref<16x256xf32, #tpu.memory_space<vmem>>, vector<1x256xf32>
    %5 = vector.broadcast %4 : vector<1x256xf32> to vector<8x256xf32>
    %6 = arith.addf %3, %5 : vector<8x256xf32>
    %cst_5 = arith.constant 0.000000e+00 : f32
    %7 = vector.broadcast %cst_5 : f32 to vector<8x256xf32>
    %8 = arith.maximumf %6, %7 : vector<8x256xf32>
    %c0_6 = arith.constant 0 : index
    %c0_7 = arith.constant 0 : index
    %9 = vector.load %arg7[%c0_6, %c0_7] : memref<744x32xf32, #tpu.memory_space<vmem>>, vector<256x32xf32>
    %cst_8 = arith.constant dense<0.000000e+00> : vector<8x32xf32>
    %10 = tpu.matmul %8, %9, %cst_8 {dimension_numbers = #tpu.dot_dimension_numbers<[1], [0], [0], [1], [0, 0, 1, 1], [], []>} : vector<8x256xf32>, vector<256x32xf32>, vector<8x32xf32> -> vector<8x32xf32>
    %c1 = arith.constant 1 : index
    %c0_9 = arith.constant 0 : index
    %11 = vector.load %arg9[%c1, %c0_9] : memref<16x256xf32, #tpu.memory_space<vmem>>, vector<1x32xf32>
    %12 = vector.broadcast %11 : vector<1x32xf32> to vector<8x32xf32>
    %13 = arith.addf %10, %12 : vector<8x32xf32>
    %cst_10 = arith.constant 0.000000e+00 : f32
    %14 = vector.broadcast %cst_10 : f32 to vector<8x32xf32>
    %15 = arith.maximumf %13, %14 : vector<8x32xf32>
    %c680 = arith.constant 680 : index
    %c0_11 = arith.constant 0 : index
    %16 = vector.load %arg7[%c680, %c0_11] : memref<744x32xf32, #tpu.memory_space<vmem>>, vector<32x32xf32>
    %cst_12 = arith.constant dense<0.000000e+00> : vector<8x32xf32>
    %17 = tpu.matmul %15, %16, %cst_12 {dimension_numbers = #tpu.dot_dimension_numbers<[1], [0], [0], [1], [0, 0, 1, 1], [], []>} : vector<8x32xf32>, vector<32x32xf32>, vector<8x32xf32> -> vector<8x32xf32>
    %c2 = arith.constant 2 : index
    %c0_13 = arith.constant 0 : index
    %18 = vector.load %arg9[%c2, %c0_13] : memref<16x256xf32, #tpu.memory_space<vmem>>, vector<1x32xf32>
    %19 = vector.broadcast %18 : vector<1x32xf32> to vector<8x32xf32>
    %20 = arith.addf %17, %19 : vector<8x32xf32>
    %cst_14 = arith.constant 0.000000e+00 : f32
    %21 = vector.broadcast %cst_14 : f32 to vector<8x32xf32>
    %22 = arith.maximumf %20, %21 : vector<8x32xf32>
    %c0_15 = arith.constant 0 : index
    %c0_16 = arith.constant 0 : index
    %23 = vector.load %arg2[%c0_15, %c0_16] : memref<8x837xf32, #tpu.memory_space<vmem>>, vector<8x837xf32>
    %24 = arith.truncf %23 : vector<8x837xf32> to vector<8x837xbf16>
    %c0_17 = arith.constant 0 : index
    %c0_18 = arith.constant 0 : index
    %25 = vector.load %arg6[%c0_17, %c0_18] : memref<837x256xbf16, #tpu.memory_space<vmem>>, vector<837x256xbf16>
    %cst_19 = arith.constant dense<0.000000e+00> : vector<8x256xf32>
    %26 = tpu.matmul %24, %25, %cst_19 {dimension_numbers = #tpu.dot_dimension_numbers<[1], [0], [0], [1], [0, 0, 1, 1], [], []>} : vector<8x837xbf16>, vector<837x256xbf16>, vector<8x256xf32> -> vector<8x256xf32>
    %c3 = arith.constant 3 : index
    %c0_20 = arith.constant 0 : index
    %27 = vector.load %arg9[%c3, %c0_20] : memref<16x256xf32, #tpu.memory_space<vmem>>, vector<1x256xf32>
    %28 = vector.broadcast %27 : vector<1x256xf32> to vector<8x256xf32>
    %29 = arith.addf %26, %28 : vector<8x256xf32>
    %cst_21 = arith.constant 0.000000e+00 : f32
    %30 = vector.broadcast %cst_21 : f32 to vector<8x256xf32>
    %31 = arith.maximumf %29, %30 : vector<8x256xf32>
    %c256 = arith.constant 256 : index
    %c0_22 = arith.constant 0 : index
    %32 = vector.load %arg7[%c256, %c0_22] : memref<744x32xf32, #tpu.memory_space<vmem>>, vector<256x32xf32>
    %cst_23 = arith.constant dense<0.000000e+00> : vector<8x32xf32>
    %33 = tpu.matmul %31, %32, %cst_23 {dimension_numbers = #tpu.dot_dimension_numbers<[1], [0], [0], [1], [0, 0, 1, 1], [], []>} : vector<8x256xf32>, vector<256x32xf32>, vector<8x32xf32> -> vector<8x32xf32>
    %c4 = arith.constant 4 : index
    %c0_24 = arith.constant 0 : index
    %34 = vector.load %arg9[%c4, %c0_24] : memref<16x256xf32, #tpu.memory_space<vmem>>, vector<1x32xf32>
    %35 = vector.broadcast %34 : vector<1x32xf32> to vector<8x32xf32>
    %36 = arith.addf %33, %35 : vector<8x32xf32>
    %cst_25 = arith.constant 0.000000e+00 : f32
    %37 = vector.broadcast %cst_25 : f32 to vector<8x32xf32>
    %38 = arith.maximumf %36, %37 : vector<8x32xf32>
    %c0_26 = arith.constant 0 : index
    %c0_27 = arith.constant 0 : index
    %39 = vector.load %arg3[%c0_26, %c0_27] : memref<8x104xf32, #tpu.memory_space<vmem>>, vector<8x104xf32>
    %c512 = arith.constant 512 : index
    %c0_28 = arith.constant 0 : index
    %40 = vector.load %arg7[%c512, %c0_28] : memref<744x32xf32, #tpu.memory_space<vmem>>, vector<104x32xf32>
    %cst_29 = arith.constant dense<0.000000e+00> : vector<8x32xf32>
    %41 = tpu.matmul %39, %40, %cst_29 {dimension_numbers = #tpu.dot_dimension_numbers<[1], [0], [0], [1], [0, 0, 1, 1], [], []>} : vector<8x104xf32>, vector<104x32xf32>, vector<8x32xf32> -> vector<8x32xf32>
    %c616 = arith.constant 616 : index
    %c0_30 = arith.constant 0 : index
    %42 = vector.load %arg7[%c616, %c0_30] : memref<744x32xf32, #tpu.memory_space<vmem>>, vector<32x32xf32>
    %cst_31 = arith.constant dense<0.000000e+00> : vector<8x32xf32>
    %43 = tpu.matmul %38, %42, %cst_31 {dimension_numbers = #tpu.dot_dimension_numbers<[1], [0], [0], [1], [0, 0, 1, 1], [], []>} : vector<8x32xf32>, vector<32x32xf32>, vector<8x32xf32> -> vector<8x32xf32>
    %44 = arith.addf %41, %43 : vector<8x32xf32>
    %c5 = arith.constant 5 : index
    %c0_32 = arith.constant 0 : index
    %45 = vector.load %arg9[%c5, %c0_32] : memref<16x256xf32, #tpu.memory_space<vmem>>, vector<1x32xf32>
    %46 = vector.broadcast %45 : vector<1x32xf32> to vector<8x32xf32>
    %47 = arith.addf %44, %46 : vector<8x32xf32>
    %cst_33 = arith.constant 0.000000e+00 : f32
    %48 = vector.broadcast %cst_33 : f32 to vector<8x32xf32>
    %49 = arith.maximumf %47, %48 : vector<8x32xf32>
    %c0_34 = arith.constant 0 : index
    %c0_35 = arith.constant 0 : index
    %50 = vector.load %arg8[%c0_34, %c0_35] : memref<448x64xf32, #tpu.memory_space<vmem>>, vector<32x64xf32>
    %cst_36 = arith.constant dense<0.000000e+00> : vector<8x64xf32>
    %51 = tpu.matmul %49, %50, %cst_36 {dimension_numbers = #tpu.dot_dimension_numbers<[1], [0], [0], [1], [0, 0, 1, 1], [], []>} : vector<8x32xf32>, vector<32x64xf32>, vector<8x64xf32> -> vector<8x64xf32>
    %c6 = arith.constant 6 : index
    %c0_37 = arith.constant 0 : index
    %52 = vector.load %arg9[%c6, %c0_37] : memref<16x256xf32, #tpu.memory_space<vmem>>, vector<1x64xf32>
    %53 = vector.broadcast %52 : vector<1x64xf32> to vector<8x64xf32>
    %54 = arith.addf %51, %53 : vector<8x64xf32>
    %cst_38 = arith.constant 0.000000e+00 : f32
    %55 = vector.broadcast %cst_38 : f32 to vector<8x64xf32>
    %56 = arith.maximumf %54, %55 : vector<8x64xf32>
    %c32 = arith.constant 32 : index
    %c0_39 = arith.constant 0 : index
    %57 = vector.load %arg8[%c32, %c0_39] : memref<448x64xf32, #tpu.memory_space<vmem>>, vector<64x64xf32>
    %cst_40 = arith.constant dense<0.000000e+00> : vector<8x64xf32>
    %58 = tpu.matmul %56, %57, %cst_40 {dimension_numbers = #tpu.dot_dimension_numbers<[1], [0], [0], [1], [0, 0, 1, 1], [], []>} : vector<8x64xf32>, vector<64x64xf32>, vector<8x64xf32> -> vector<8x64xf32>
    %c7 = arith.constant 7 : index
    %c0_41 = arith.constant 0 : index
    %59 = vector.load %arg9[%c7, %c0_41] : memref<16x256xf32, #tpu.memory_space<vmem>>, vector<1x64xf32>
    %60 = vector.broadcast %59 : vector<1x64xf32> to vector<8x64xf32>
    %61 = arith.addf %58, %60 : vector<8x64xf32>
    %c0_42 = arith.constant 0 : index
    %c0_43 = arith.constant 0 : index
    %62 = vector.load %arg4[%c0_42, %c0_43] : memref<8x32xf32, #tpu.memory_space<vmem>>, vector<8x32xf32>
    %c648 = arith.constant 648 : index
    %c0_44 = arith.constant 0 : index
    %63 = vector.load %arg7[%c648, %c0_44] : memref<744x32xf32, #tpu.memory_space<vmem>>, vector<32x32xf32>
    %cst_45 = arith.constant dense<0.000000e+00> : vector<8x32xf32>
    %64 = tpu.matmul %62, %63, %cst_45 {dimension_numbers = #tpu.dot_dimension_numbers<[1], [0], [0], [1], [0, 0, 1, 1], [], []>} : vector<8x32xf32>, vector<32x32xf32>, vector<8x32xf32> -> vector<8x32xf32>
    %c712 = arith.constant 712 : index
    %c0_46 = arith.constant 0 : index
    %65 = vector.load %arg7[%c712, %c0_46] : memref<744x32xf32, #tpu.memory_space<vmem>>, vector<32x32xf32>
    %cst_47 = arith.constant dense<0.000000e+00> : vector<8x32xf32>
    %66 = tpu.matmul %22, %65, %cst_47 {dimension_numbers = #tpu.dot_dimension_numbers<[1], [0], [0], [1], [0, 0, 1, 1], [], []>} : vector<8x32xf32>, vector<32x32xf32>, vector<8x32xf32> -> vector<8x32xf32>
    %67 = arith.addf %64, %66 : vector<8x32xf32>
    %c8 = arith.constant 8 : index
    %c0_48 = arith.constant 0 : index
    %68 = vector.load %arg9[%c8, %c0_48] : memref<16x256xf32, #tpu.memory_space<vmem>>, vector<1x32xf32>
    %69 = vector.broadcast %68 : vector<1x32xf32> to vector<8x32xf32>
    %70 = arith.addf %67, %69 : vector<8x32xf32>
    %cst_49 = arith.constant 0.000000e+00 : f32
    %71 = vector.broadcast %cst_49 : f32 to vector<8x32xf32>
    %72 = arith.maximumf %70, %71 : vector<8x32xf32>
    %c96 = arith.constant 96 : index
    %c0_50 = arith.constant 0 : index
    %73 = vector.load %arg8[%c96, %c0_50] : memref<448x64xf32, #tpu.memory_space<vmem>>, vector<32x64xf32>
    %cst_51 = arith.constant dense<0.000000e+00> : vector<8x64xf32>
    %74 = tpu.matmul %72, %73, %cst_51 {dimension_numbers = #tpu.dot_dimension_numbers<[1], [0], [0], [1], [0, 0, 1, 1], [], []>} : vector<8x32xf32>, vector<32x64xf32>, vector<8x64xf32> -> vector<8x64xf32>
    %c9 = arith.constant 9 : index
    %c0_52 = arith.constant 0 : index
    %75 = vector.load %arg9[%c9, %c0_52] : memref<16x256xf32, #tpu.memory_space<vmem>>, vector<1x64xf32>
    %76 = vector.broadcast %75 : vector<1x64xf32> to vector<8x64xf32>
    %77 = arith.addf %74, %76 : vector<8x64xf32>
    %cst_53 = arith.constant 0.000000e+00 : f32
    %78 = vector.broadcast %cst_53 : f32 to vector<8x64xf32>
    %79 = arith.maximumf %77, %78 : vector<8x64xf32>
    %c128 = arith.constant 128 : index
    %c0_54 = arith.constant 0 : index
    %80 = vector.load %arg8[%c128, %c0_54] : memref<448x64xf32, #tpu.memory_space<vmem>>, vector<64x64xf32>
    %cst_55 = arith.constant dense<0.000000e+00> : vector<8x64xf32>
    %81 = tpu.matmul %79, %80, %cst_55 {dimension_numbers = #tpu.dot_dimension_numbers<[1], [0], [0], [1], [0, 0, 1, 1], [], []>} : vector<8x64xf32>, vector<64x64xf32>, vector<8x64xf32> -> vector<8x64xf32>
    %c10 = arith.constant 10 : index
    %c0_56 = arith.constant 0 : index
    %82 = vector.load %arg9[%c10, %c0_56] : memref<16x256xf32, #tpu.memory_space<vmem>>, vector<1x64xf32>
    %83 = vector.broadcast %82 : vector<1x64xf32> to vector<8x64xf32>
    %84 = arith.addf %81, %83 : vector<8x64xf32>
    %c192 = arith.constant 192 : index
    %c0_57 = arith.constant 0 : index
    %85 = vector.load %arg8[%c192, %c0_57] : memref<448x64xf32, #tpu.memory_space<vmem>>, vector<64x64xf32>
    %cst_58 = arith.constant dense<0.000000e+00> : vector<8x64xf32>
    %86 = tpu.matmul %61, %85, %cst_58 {dimension_numbers = #tpu.dot_dimension_numbers<[1], [0], [0], [1], [0, 0, 1, 1], [], []>} : vector<8x64xf32>, vector<64x64xf32>, vector<8x64xf32> -> vector<8x64xf32>
    %c256_59 = arith.constant 256 : index
    %c0_60 = arith.constant 0 : index
    %87 = vector.load %arg8[%c256_59, %c0_60] : memref<448x64xf32, #tpu.memory_space<vmem>>, vector<64x64xf32>
    %cst_61 = arith.constant dense<0.000000e+00> : vector<8x64xf32>
    %88 = tpu.matmul %84, %87, %cst_61 {dimension_numbers = #tpu.dot_dimension_numbers<[1], [0], [0], [1], [0, 0, 1, 1], [], []>} : vector<8x64xf32>, vector<64x64xf32>, vector<8x64xf32> -> vector<8x64xf32>
    %89 = arith.addf %86, %88 : vector<8x64xf32>
    %c11 = arith.constant 11 : index
    %c0_62 = arith.constant 0 : index
    %90 = vector.load %arg9[%c11, %c0_62] : memref<16x256xf32, #tpu.memory_space<vmem>>, vector<1x64xf32>
    %91 = vector.broadcast %90 : vector<1x64xf32> to vector<8x64xf32>
    %92 = arith.addf %89, %91 : vector<8x64xf32>
    %cst_63 = arith.constant 0.000000e+00 : f32
    %93 = vector.broadcast %cst_63 : f32 to vector<8x64xf32>
    %94 = arith.maximumf %92, %93 : vector<8x64xf32>
    %c320 = arith.constant 320 : index
    %c0_64 = arith.constant 0 : index
    %95 = vector.load %arg8[%c320, %c0_64] : memref<448x64xf32, #tpu.memory_space<vmem>>, vector<64x64xf32>
    %cst_65 = arith.constant dense<0.000000e+00> : vector<8x64xf32>
    %96 = tpu.matmul %94, %95, %cst_65 {dimension_numbers = #tpu.dot_dimension_numbers<[1], [0], [0], [1], [0, 0, 1, 1], [], []>} : vector<8x64xf32>, vector<64x64xf32>, vector<8x64xf32> -> vector<8x64xf32>
    %c12 = arith.constant 12 : index
    %c0_66 = arith.constant 0 : index
    %97 = vector.load %arg9[%c12, %c0_66] : memref<16x256xf32, #tpu.memory_space<vmem>>, vector<1x64xf32>
    %98 = vector.broadcast %97 : vector<1x64xf32> to vector<8x64xf32>
    %99 = arith.addf %96, %98 : vector<8x64xf32>
    %cst_67 = arith.constant 0.000000e+00 : f32
    %100 = vector.broadcast %cst_67 : f32 to vector<8x64xf32>
    %101 = arith.maximumf %99, %100 : vector<8x64xf32>
    %c384 = arith.constant 384 : index
    %c0_68 = arith.constant 0 : index
    %102 = vector.load %arg8[%c384, %c0_68] : memref<448x64xf32, #tpu.memory_space<vmem>>, vector<64x64xf32>
    %cst_69 = arith.constant dense<0.000000e+00> : vector<8x64xf32>
    %103 = tpu.matmul %101, %102, %cst_69 {dimension_numbers = #tpu.dot_dimension_numbers<[1], [0], [0], [1], [0, 0, 1, 1], [], []>} : vector<8x64xf32>, vector<64x64xf32>, vector<8x64xf32> -> vector<8x64xf32>
    %c13 = arith.constant 13 : index
    %c0_70 = arith.constant 0 : index
    %104 = vector.load %arg9[%c13, %c0_70] : memref<16x256xf32, #tpu.memory_space<vmem>>, vector<1x64xf32>
    %105 = vector.broadcast %104 : vector<1x64xf32> to vector<8x64xf32>
    %106 = arith.addf %103, %105 : vector<8x64xf32>
    %107 = vector.extract_strided_slice %106 {offsets = [0, 0], sizes = [8, 1], strides = [1, 1]} : vector<8x64xf32> to vector<8x1xf32>
    %108 = arith.negf %107 : vector<8x1xf32>
    %109 = math.exp %108 : vector<8x1xf32>
    %cst_71 = arith.constant 1.000000e+00 : f32
    %110 = vector.broadcast %cst_71 : f32 to vector<8x1xf32>
    %111 = arith.addf %110, %109 : vector<8x1xf32>
    %112 = arith.divf %110, %111 : vector<8x1xf32>
    %c0_72 = arith.constant 0 : index
    %c0_73 = arith.constant 0 : index
    %113 = vector.load %arg10[%c0_72, %c0_73] : memref<8x1xf32, #tpu.memory_space<vmem>>, vector<8x1xf32>
    tpu.vector_store %arg10[%c0_72, %c0_73], %112 {strides = array<i32>} : memref<8x1xf32, #tpu.memory_space<vmem>>, vector<8x1xf32>,
    return
  }
  func.func @transform_0(%arg0: i32) -> (i32, i32) {
    %c0_i32 = arith.constant 0 : i32
    %c0_i32_0 = arith.constant 0 : i32
    return %arg0, %c0_i32 : i32, i32
  }
  func.func @transform_1(%arg0: i32) -> (i32, i32) {
    %c0_i32 = arith.constant 0 : i32
    %c0_i32_0 = arith.constant 0 : i32
    return %arg0, %c0_i32 : i32, i32
  }
  func.func @transform_2(%arg0: i32) -> (i32, i32) {
    %c0_i32 = arith.constant 0 : i32
    %c0_i32_0 = arith.constant 0 : i32
    return %arg0, %c0_i32 : i32, i32
  }
  func.func @transform_3(%arg0: i32) -> (i32, i32) {
    %c0_i32 = arith.constant 0 : i32
    %c0_i32_0 = arith.constant 0 : i32
    return %arg0, %c0_i32 : i32, i32
  }
  func.func @transform_4(%arg0: i32) -> (i32, i32) {
    %c0_i32 = arith.constant 0 : i32
    %c0_i32_0 = arith.constant 0 : i32
    %c0_i32_1 = arith.constant 0 : i32
    return %c0_i32, %c0_i32_0 : i32, i32
  }
  func.func @transform_5(%arg0: i32) -> (i32, i32) {
    %c0_i32 = arith.constant 0 : i32
    %c0_i32_0 = arith.constant 0 : i32
    %c0_i32_1 = arith.constant 0 : i32
    return %c0_i32, %c0_i32_0 : i32, i32
  }
  func.func @transform_6(%arg0: i32) -> (i32, i32) {
    %c0_i32 = arith.constant 0 : i32
    %c0_i32_0 = arith.constant 0 : i32
    %c0_i32_1 = arith.constant 0 : i32
    return %c0_i32, %c0_i32_0 : i32, i32
  }
  func.func @transform_7(%arg0: i32) -> (i32, i32) {
    %c0_i32 = arith.constant 0 : i32
    %c0_i32_0 = arith.constant 0 : i32
    %c0_i32_1 = arith.constant 0 : i32
    return %c0_i32, %c0_i32_0 : i32, i32
  }
  func.func @transform_8(%arg0: i32) -> (i32, i32) {
    %c0_i32 = arith.constant 0 : i32
    %c0_i32_0 = arith.constant 0 : i32
    %c0_i32_1 = arith.constant 0 : i32
    return %c0_i32, %c0_i32_0 : i32, i32
  }
  func.func @transform_9(%arg0: i32) -> (i32, i32) {
    %c0_i32 = arith.constant 0 : i32
    %c0_i32_0 = arith.constant 0 : i32
    return %arg0, %c0_i32 : i32, i32
  }
}

</mosaic_0001>

<llo_original>
// kernel: tpu_custom_call.1
$region0: #{tpu_custom_call.1}
  #allocation0 [shape = 'u32[]', space=smem, size = 0x4, offset = 0x4, fixed_abs, tag = 'smem constant byte address 0x4 - core index']
  #allocation1 [shape = 'u32[144,128]{1,0:T(1,128)}', space=vmem, size = 0x12000, scoped, tag = 'internal scratch']
  %s0 = inlined_call_operand.hbm [shape: f32[8,768], index: 0, kind: input, shape index: {}]
  %s1 = inlined_call_operand.hbm [shape: f32[8,837], index: 1, kind: input, shape index: {}]
  %s2 = inlined_call_operand.vmem [shape: f32[8,104], index: 2, kind: input, shape index: {}]
  %s3 = inlined_call_operand.hbm [shape: f32[8,32], index: 3, kind: input, shape index: {}]
  %s4 = inlined_call_operand.vmem [shape: bf16[768,256], index: 4, kind: input, shape index: {}]
  %s5 = inlined_call_operand.vmem [shape: bf16[837,256], index: 5, kind: input, shape index: {}]
  %s6 = inlined_call_operand.vmem [shape: f32[744,32], index: 6, kind: input, shape index: {}]
  %s7 = inlined_call_operand.vmem [shape: f32[448,64], index: 7, kind: input, shape index: {}]
  %s8 = inlined_call_operand.vmem [shape: f32[16,256], index: 8, kind: input, shape index: {}]
  %s9 = inlined_call_operand.vmem [shape: f32[8,1], index: 9, kind: output, shape index: {}]
  %s10 = sld [smem:[#allocation0]]
  $region58: #{tpu_custom_call.1} parent=0
    _
  %s12 = ssub.s32 1, %s10
  %s13 = scalar_select 0, %s12, %s10
  $region1: #{tpu_custom_call.1} parent=0
    #allocation2 [shape = 'u8[24576]{0}', space=vmem, size = 0x6000, scoped, tag = 'input window, operand 0, single buffered']
    #allocation3 [shape = 's32[1]{0}', space=sflag, size = 0x4, scoped, tag = 'scoped memory for tpu_custom_call.1']
    #allocation4 [shape = 'u8[28672]{0}', space=vmem, size = 0x7000, scoped, tag = 'input window, operand 1, single buffered']
    #allocation5 [shape = 's32[1]{0}', space=sflag, size = 0x4, scoped, tag = 'scoped memory for tpu_custom_call.1']
    #allocation6 [shape = 'u8[4096]{0}', space=vmem, size = 0x1000, scoped, tag = 'input window, operand 3, single buffered']
    %14 = vsyncpa [#allocation3], 0
    %15 = vsyncpa [#allocation5], 0
    // Predicated region
    $region2: #{tpu_custom_call.1} parent=1 // pred_check
      _
    $region3: #{tpu_custom_call.1} parent=1 // pred_check_branch
      %17 = sbr.rel (0) target = $region5
    $region4: #{tpu_custom_call.1} parent=1 // pred_region
      %s19 = ssub.s32 768, 768
      %20 = vsyncadd [#allocation3], %s19
      %s22 = sshll.u32 [#allocation2], 4
      %s23 = int_to_ptr.vmem [resolvable:$true] %s22
      %25 = dma.hbm_to_vmem [thread:$0]  %s0, 768, %s23, [#allocation3]
    $region5: #{tpu_custom_call.1} parent=1 // pred_fallthru
      _
    // Predicated region
    $region6: #{tpu_custom_call.1} parent=1 // pred_check
      _
    $region7: #{tpu_custom_call.1} parent=1 // pred_check_branch
      %27 = sbr.rel (0) target = $region9
    $region8: #{tpu_custom_call.1} parent=1 // pred_region
      %s29 = ssub.s32 896, 896
      %30 = vsyncadd [#allocation5], %s29
      %s32 = sshll.u32 [#allocation4], 4
      %s33 = int_to_ptr.vmem [resolvable:$true] %s32
      %35 = dma.hbm_to_vmem [thread:$0]  %s1, 896, %s33, [#allocation5]
    $region9: #{tpu_custom_call.1} parent=1 // pred_fallthru
      _
    // Predicated region
    $region10: #{tpu_custom_call.1} parent=1 // pred_check
      _
    $region11: #{tpu_custom_call.1} parent=1 // pred_check_branch
      %37 = sbr.rel (0) target = $region13
    $region12: #{tpu_custom_call.1} parent=1 // pred_region
      _
    $region13: #{tpu_custom_call.1} parent=1 // pred_fallthru
      _
    // Predicated region
    $region14: #{tpu_custom_call.1} parent=1 // pred_check
      _
    $region15: #{tpu_custom_call.1} parent=1 // pred_check_branch
      %39 = sbr.rel (0) target = $region17
    $region16: #{tpu_custom_call.1} parent=1 // pred_region
      %s41 = ssub.s32 128, 128
      %42 = vsyncadd [#allocation5], %s41
      %s44 = sshll.u32 [#allocation6], 4
      %s45 = int_to_ptr.vmem [resolvable:$true] %s44
      %47 = dma.hbm_to_vmem [thread:$0]  %s3, 128, %s45, [#allocation5]
    $region17: #{tpu_custom_call.1} parent=1 // pred_fallthru
      _
    // Predicated region
    $region18: #{tpu_custom_call.1} parent=1 // pred_check
      _
    $region19: #{tpu_custom_call.1} parent=1 // pred_check_branch
      %49 = sbr.rel (0) target = $region21
    $region20: #{tpu_custom_call.1} parent=1 // pred_region
      _
    $region21: #{tpu_custom_call.1} parent=1 // pred_fallthru
      _
    // Predicated region
    $region22: #{tpu_custom_call.1} parent=1 // pred_check
      _
    $region23: #{tpu_custom_call.1} parent=1 // pred_check_branch
      %51 = sbr.rel (0) target = $region25
    $region24: #{tpu_custom_call.1} parent=1 // pred_region
      _
    $region25: #{tpu_custom_call.1} parent=1 // pred_fallthru
      _
    // Predicated region
    $region26: #{tpu_custom_call.1} parent=1 // pred_check
      _
    $region27: #{tpu_custom_call.1} parent=1 // pred_check_branch
      %53 = sbr.rel (0) target = $region29
    $region28: #{tpu_custom_call.1} parent=1 // pred_region
      _
    $region29: #{tpu_custom_call.1} parent=1 // pred_fallthru
      _
    // Predicated region
    $region30: #{tpu_custom_call.1} parent=1 // pred_check
      _
    $region31: #{tpu_custom_call.1} parent=1 // pred_check_branch
      %55 = sbr.rel (0) target = $region33
    $region32: #{tpu_custom_call.1} parent=1 // pred_region
      _
    $region33: #{tpu_custom_call.1} parent=1 // pred_fallthru
      _
    // Predicated region
    $region34: #{tpu_custom_call.1} parent=1 // pred_check
      _
    $region35: #{tpu_custom_call.1} parent=1 // pred_check_branch
      %57 = sbr.rel (0) target = $region37
    $region36: #{tpu_custom_call.1} parent=1 // pred_region
      _
    $region37: #{tpu_custom_call.1} parent=1 // pred_fallthru
      _
    // Predicated region
    $region38: #{tpu_custom_call.1} parent=1 // pred_check
      _
    $region39: #{tpu_custom_call.1} parent=1 // pred_check_branch
      %59 = sbr.rel (0) target = $region41
    $region40: #{tpu_custom_call.1} parent=1 // pred_region
      %60 = dma.done [#allocation3], 768
    $region41: #{tpu_custom_call.1} parent=1 // pred_fallthru
      _
    // Predicated region
    $region42: #{tpu_custom_call.1} parent=1 // pred_check
      _
    $region43: #{tpu_custom_call.1} parent=1 // pred_check_branch
      %62 = sbr.rel (0) target = $region45
    $region44: #{tpu_custom_call.1} parent=1 // pred_region
      %63 = dma.done [#allocation5], 896
    $region45: #{tpu_custom_call.1} parent=1 // pred_fallthru
      _
    // Predicated region
    $region46: #{tpu_custom_call.1} parent=1 // pred_check
      _
    $region47: #{tpu_custom_call.1} parent=1 // pred_check_branch
      %65 = sbr.rel (0) target = $region49
    $region48: #{tpu_custom_call.1} parent=1 // pred_region
      %66 = dma.done [#allocation5], 128
    $region49: #{tpu_custom_call.1} parent=1 // pred_fallthru
      _
    %v68 = vld [vmem:[#allocation2] sm:$0xff]
    %v69 = vld [vmem:[#allocation2 + $0x8] sm:$0xff]
    %v70 = vld [vmem:[#allocation2 + $0x10] sm:$0xff]
    %v71 = vld [vmem:[#allocation2 + $0x18] sm:$0xff]
    %v72 = vld [vmem:[#allocation2 + $0x20] sm:$0xff]
    %v73 = vld [vmem:[#allocation2 + $0x28] sm:$0xff]
    %v74 = vpack.c.bf16 %v68, %v68
    %v75 = vpack.c.bf16 %v69, %v69
    %v76 = vpack.c.bf16 %v70, %v70
    %v77 = vpack.c.bf16 %v71, %v71
    %v78 = vpack.c.bf16 %v72, %v72
    %v79 = vpack.c.bf16 %v73, %v73
    %v80 = vld [vmem:[%s4] sm:$0xff]
    %v81 = vld [vmem:[%s4 + $0x8] sm:$0xff]
    %v82 = vld [vmem:[%s4 + $0x10] sm:$0xff]
    %v83 = vld [vmem:[%s4 + $0x18] sm:$0xff]
    %v84 = vld [vmem:[%s4 + $0x20] sm:$0xff]
    %v85 = vld [vmem:[%s4 + $0x28] sm:$0xff]
    %v86 = vld [vmem:[%s4 + $0x30] sm:$0xff]
    %v87 = vld [vmem:[%s4 + $0x38] sm:$0xff]
    %v88 = vld [vmem:[%s4 + $0x40] sm:$0xff]
    %v89 = vld [vmem:[%s4 + $0x48] sm:$0xff]
    %v90 = vld [vmem:[%s4 + $0x50] sm:$0xff]
    %v91 = vld [vmem:[%s4 + $0x58] sm:$0xff]
    %v92 = vld [vmem:[%s4 + $0x60] sm:$0xff]
    %v93 = vld [vmem:[%s4 + $0x68] sm:$0xff]
    %v94 = vld [vmem:[%s4 + $0x70] sm:$0xff]
    %v95 = vld [vmem:[%s4 + $0x78] sm:$0xff]
    %v96 = vld [vmem:[%s4 + $0x80] sm:$0xff]
    %v97 = vld [vmem:[%s4 + $0x88] sm:$0xff]
    %v98 = vld [vmem:[%s4 + $0x90] sm:$0xff]
    %v99 = vld [vmem:[%s4 + $0x98] sm:$0xff]
    %v100 = vld [vmem:[%s4 + $0xa0] sm:$0xff]
    %v101 = vld [vmem:[%s4 + $0xa8] sm:$0xff]
    %v102 = vld [vmem:[%s4 + $0xb0] sm:$0xff]
    %v103 = vld [vmem:[%s4 + $0xb8] sm:$0xff]
    %v104 = vld [vmem:[%s4 + $0xc0] sm:$0xff]
    %v105 = vld [vmem:[%s4 + $0xc8] sm:$0xff]
    %v106 = vld [vmem:[%s4 + $0xd0] sm:$0xff]
    %v107 = vld [vmem:[%s4 + $0xd8] sm:$0xff]
    %v108 = vld [vmem:[%s4 + $0xe0] sm:$0xff]
    %v109 = vld [vmem:[%s4 + $0xe8] sm:$0xff]
    %v110 = vld [vmem:[%s4 + $0xf0] sm:$0xff]
    %v111 = vld [vmem:[%s4 + $0xf8] sm:$0xff]
    %v112 = vld [vmem:[%s4 + $0x100] sm:$0xff]
    %v113 = vld [vmem:[%s4 + $0x108] sm:$0xff]
    %v114 = vld [vmem:[%s4 + $0x110] sm:$0xff]
    %v115 = vld [vmem:[%s4 + $0x118] sm:$0xff]
    %v116 = vld [vmem:[%s4 + $0x120] sm:$0xff]
    %v117 = vld [vmem:[%s4 + $0x128] sm:$0xff]
    %v118 = vld [vmem:[%s4 + $0x130] sm:$0xff]
    %v119 = vld [vmem:[%s4 + $0x138] sm:$0xff]
    %v120 = vld [vmem:[%s4 + $0x140] sm:$0xff]
    %v121 = vld [vmem:[%s4 + $0x148] sm:$0xff]
    %v122 = vld [vmem:[%s4 + $0x150] sm:$0xff]
    %v123 = vld [vmem:[%s4 + $0x158] sm:$0xff]
    %v124 = vld [vmem:[%s4 + $0x160] sm:$0xff]
    %v125 = vld [vmem:[%s4 + $0x168] sm:$0xff]
    %v126 = vld [vmem:[%s4 + $0x170] sm:$0xff]
    %v127 = vld [vmem:[%s4 + $0x178] sm:$0xff]
    %v128 = vld [vmem:[%s4 + $0x180] sm:$0xff]
    %v129 = vld [vmem:[%s4 + $0x188] sm:$0xff]
    %v130 = vld [vmem:[%s4 + $0x190] sm:$0xff]
    %v131 = vld [vmem:[%s4 + $0x198] sm:$0xff]
    %v132 = vld [vmem:[%s4 + $0x1a0] sm:$0xff]
    %v133 = vld [vmem:[%s4 + $0x1a8] sm:$0xff]
    %v134 = vld [vmem:[%s4 + $0x1b0] sm:$0xff]
    %v135 = vld [vmem:[%s4 + $0x1b8] sm:$0xff]
    %v136 = vld [vmem:[%s4 + $0x1c0] sm:$0xff]
    %v137 = vld [vmem:[%s4 + $0x1c8] sm:$0xff]
    %v138 = vld [vmem:[%s4 + $0x1d0] sm:$0xff]
    %v139 = vld [vmem:[%s4 + $0x1d8] sm:$0xff]
    %v140 = vld [vmem:[%s4 + $0x1e0] sm:$0xff]
    %v141 = vld [vmem:[%s4 + $0x1e8] sm:$0xff]
    %v142 = vld [vmem:[%s4 + $0x1f0] sm:$0xff]
    %v143 = vld [vmem:[%s4 + $0x1f8] sm:$0xff]
    %v144 = vld [vmem:[%s4 + $0x200] sm:$0xff]
    %v145 = vld [vmem:[%s4 + $0x208] sm:$0xff]
    %v146 = vld [vmem:[%s4 + $0x210] sm:$0xff]
    %v147 = vld [vmem:[%s4 + $0x218] sm:$0xff]
    %v148 = vld [vmem:[%s4 + $0x220] sm:$0xff]
    %v149 = vld [vmem:[%s4 + $0x228] sm:$0xff]
    %v150 = vld [vmem:[%s4 + $0x230] sm:$0xff]
    %v151 = vld [vmem:[%s4 + $0x238] sm:$0xff]
    %v152 = vld [vmem:[%s4 + $0x240] sm:$0xff]
    %v153 = vld [vmem:[%s4 + $0x248] sm:$0xff]
    %v154 = vld [vmem:[%s4 + $0x250] sm:$0xff]
    %v155 = vld [vmem:[%s4 + $0x258] sm:$0xff]
    %v156 = vld [vmem:[%s4 + $0x260] sm:$0xff]
    %v157 = vld [vmem:[%s4 + $0x268] sm:$0xff]
    %v158 = vld [vmem:[%s4 + $0x270] sm:$0xff]
    %v159 = vld [vmem:[%s4 + $0x278] sm:$0xff]
    %v160 = vld [vmem:[%s4 + $0x280] sm:$0xff]
    %v161 = vld [vmem:[%s4 + $0x288] sm:$0xff]
    %v162 = vld [vmem:[%s4 + $0x290] sm:$0xff]
    %v163 = vld [vmem:[%s4 + $0x298] sm:$0xff]
    %v164 = vld [vmem:[%s4 + $0x2a0] sm:$0xff]
    %v165 = vld [vmem:[%s4 + $0x2a8] sm:$0xff]
    %v166 = vld [vmem:[%s4 + $0x2b0] sm:$0xff]
    %v167 = vld [vmem:[%s4 + $0x2b8] sm:$0xff]
    %v168 = vld [vmem:[%s4 + $0x2c0] sm:$0xff]
    %v169 = vld [vmem:[%s4 + $0x2c8] sm:$0xff]
    %v170 = vld [vmem:[%s4 + $0x2d0] sm:$0xff]
    %v171 = vld [vmem:[%s4 + $0x2d8] sm:$0xff]
    %v172 = vld [vmem:[%s4 + $0x2e0] sm:$0xff]
    %v173 = vld [vmem:[%s4 + $0x2e8] sm:$0xff]
    %v174 = vld [vmem:[%s4 + $0x2f0] sm:$0xff]
    %v175 = vld [vmem:[%s4 + $0x2f8] sm:$0xff]
    %v176 = vld [vmem:[%s8] ss:$8 sm:$0x3]
    %v178 = vlaneseq
    %v179 = vshrl.u32 %v178, 7
    %v180 = vsub.s32 0, %v179
    %v181 = vrot.slane %v176, %v180
    %v182 = vlaneseq
    %v183 = vshrl.u32 %v182, 7
    %v184 = vsub.s32 1, %v183
    %v185 = vrot.slane %v176, %v184
    %v284 = vunpack.c.l.b16 %v80
    %v285 = vunpack.c.h.b16 %v80
    %v286 = vunpack.c.l.b16 %v81
    %v287 = vunpack.c.h.b16 %v81
    %v288 = vunpack.c.l.b16 %v82
    %v289 = vunpack.c.h.b16 %v82
    %v290 = vunpack.c.l.b16 %v83
    %v291 = vunpack.c.h.b16 %v83
    %v292 = vunpack.c.l.b16 %v84
    %v293 = vunpack.c.h.b16 %v84
    %v294 = vunpack.c.l.b16 %v85
    %v295 = vunpack.c.h.b16 %v85
    %v296 = vunpack.c.l.b16 %v86
    %v297 = vunpack.c.h.b16 %v86
    %v298 = vunpack.c.l.b16 %v87
    %v299 = vunpack.c.h.b16 %v87
    %v300 = vunpack.c.l.b16 %v88
    %v301 = vunpack.c.h.b16 %v88
    %v302 = vunpack.c.l.b16 %v89
    %v303 = vunpack.c.h.b16 %v89
    %v304 = vunpack.c.l.b16 %v90
    %v305 = vunpack.c.h.b16 %v90
    %v306 = vunpack.c.l.b16 %v91
    %v307 = vunpack.c.h.b16 %v91
    %v308 = vunpack.c.l.b16 %v92
    %v309 = vunpack.c.h.b16 %v92
    %v310 = vunpack.c.l.b16 %v93
    %v311 = vunpack.c.h.b16 %v93
    %v312 = vunpack.c.l.b16 %v94
    %v313 = vunpack.c.h.b16 %v94
    %v314 = vunpack.c.l.b16 %v95
    %v315 = vunpack.c.h.b16 %v95
    %v316 = vunpack.c.l.b16 %v96
    %v317 = vunpack.c.h.b16 %v96
    %v318 = vunpack.c.l.b16 %v97
    %v319 = vunpack.c.h.b16 %v97
    %v320 = vunpack.c.l.b16 %v98
    %v321 = vunpack.c.h.b16 %v98
    %v322 = vunpack.c.l.b16 %v99
    %v323 = vunpack.c.h.b16 %v99
    %v324 = vunpack.c.l.b16 %v100
    %v325 = vunpack.c.h.b16 %v100
    %v326 = vunpack.c.l.b16 %v101
    %v327 = vunpack.c.h.b16 %v101
    %v328 = vunpack.c.l.b16 %v102
    %v329 = vunpack.c.h.b16 %v102
    %v330 = vunpack.c.l.b16 %v103
    %v331 = vunpack.c.h.b16 %v103
    %v332 = vunpack.c.l.b16 %v104
    %v333 = vunpack.c.h.b16 %v104
    %v334 = vunpack.c.l.b16 %v105
    %v335 = vunpack.c.h.b16 %v105
    %v336 = vunpack.c.l.b16 %v106
    %v337 = vunpack.c.h.b16 %v106
    %v338 = vunpack.c.l.b16 %v107
    %v339 = vunpack.c.h.b16 %v107
    %v340 = vunpack.c.l.b16 %v108
    %v341 = vunpack.c.h.b16 %v108
    %v342 = vunpack.c.l.b16 %v109
    %v343 = vunpack.c.h.b16 %v109
    %v344 = vunpack.c.l.b16 %v110
    %v345 = vunpack.c.h.b16 %v110
    %v346 = vunpack.c.l.b16 %v111
    %v347 = vunpack.c.h.b16 %v111
    %v348 = vunpack.c.l.b16 %v112
    %v349 = vunpack.c.h.b16 %v112
    %v350 = vunpack.c.l.b16 %v113
    %v351 = vunpack.c.h.b16 %v113
    %v352 = vunpack.c.l.b16 %v114
    %v353 = vunpack.c.h.b16 %v114
    %v354 = vunpack.c.l.b16 %v115
    %v355 = vunpack.c.h.b16 %v115
    %v356 = vunpack.c.l.b16 %v116
    %v357 = vunpack.c.h.b16 %v116
    %v358 = vunpack.c.l.b16 %v117
    %v359 = vunpack.c.h.b16 %v117
    %v360 = vunpack.c.l.b16 %v118
    %v361 = vunpack.c.h.b16 %v118
    %v362 = vunpack.c.l.b16 %v119
    %v363 = vunpack.c.h.b16 %v119
    %v364 = vunpack.c.l.b16 %v120
    %v365 = vunpack.c.h.b16 %v120
    %v366 = vunpack.c.l.b16 %v121
    %v367 = vunpack.c.h.b16 %v121
    %v368 = vunpack.c.l.b16 %v122
    %v369 = vunpack.c.h.b16 %v122
    %v370 = vunpack.c.l.b16 %v123
    %v371 = vunpack.c.h.b16 %v123
    %v372 = vunpack.c.l.b16 %v124
    %v373 = vunpack.c.h.b16 %v124
    %v374 = vunpack.c.l.b16 %v125
    %v375 = vunpack.c.h.b16 %v125
    %v376 = vunpack.c.l.b16 %v126
    %v377 = vunpack.c.h.b16 %v126
    %v378 = vunpack.c.l.b16 %v127
    %v379 = vunpack.c.h.b16 %v127
    %v380 = vunpack.c.l.b16 %v128
    %v381 = vunpack.c.h.b16 %v128
    %v382 = vunpack.c.l.b16 %v129
    %v383 = vunpack.c.h.b16 %v129
    %v384 = vunpack.c.l.b16 %v130
    %v385 = vunpack.c.h.b16 %v130
    %v386 = vunpack.c.l.b16 %v131
    %v387 = vunpack.c.h.b16 %v131
    %v388 = vunpack.c.l.b16 %v132
    %v389 = vunpack.c.h.b16 %v132
    %v390 = vunpack.c.l.b16 %v133
    %v391 = vunpack.c.h.b16 %v133
    %v392 = vunpack.c.l.b16 %v134
    %v393 = vunpack.c.h.b16 %v134
    %v394 = vunpack.c.l.b16 %v135
    %v395 = vunpack.c.h.b16 %v135
    %v396 = vunpack.c.l.b16 %v136
    %v397 = vunpack.c.h.b16 %v136
    %v398 = vunpack.c.l.b16 %v137
    %v399 = vunpack.c.h.b16 %v137
    %v400 = vunpack.c.l.b16 %v138
    %v401 = vunpack.c.h.b16 %v138
    %v402 = vunpack.c.l.b16 %v139
    %v403 = vunpack.c.h.b16 %v139
    %v404 = vunpack.c.l.b16 %v140
    %v405 = vunpack.c.h.b16 %v140
    %v406 = vunpack.c.l.b16 %v141
    %v407 = vunpack.c.h.b16 %v141
    %v408 = vunpack.c.l.b16 %v142
    %v409 = vunpack.c.h.b16 %v142
    %v410 = vunpack.c.l.b16 %v143
    %v411 = vunpack.c.h.b16 %v143
    %v412 = vunpack.c.l.b16 %v144
    %v413 = vunpack.c.h.b16 %v144
    %v414 = vunpack.c.l.b16 %v145
    %v415 = vunpack.c.h.b16 %v145
    %v416 = vunpack.c.l.b16 %v146
    %v417 = vunpack.c.h.b16 %v146
    %v418 = vunpack.c.l.b16 %v147
    %v419 = vunpack.c.h.b16 %v147
    %v420 = vunpack.c.l.b16 %v148
    %v421 = vunpack.c.h.b16 %v148
    %v422 = vunpack.c.l.b16 %v149
    %v423 = vunpack.c.h.b16 %v149
    %v424 = vunpack.c.l.b16 %v150
    %v425 = vunpack.c.h.b16 %v150
    %v426 = vunpack.c.l.b16 %v151
    %v427 = vunpack.c.h.b16 %v151
    %v428 = vunpack.c.l.b16 %v152
    %v429 = vunpack.c.h.b16 %v152
    %v430 = vunpack.c.l.b16 %v153
    %v431 = vunpack.c.h.b16 %v153
    %v432 = vunpack.c.l.b16 %v154
    %v433 = vunpack.c.h.b16 %v154
    %v434 = vunpack.c.l.b16 %v155
    %v435 = vunpack.c.h.b16 %v155
    %v436 = vunpack.c.l.b16 %v156
    %v437 = vunpack.c.h.b16 %v156
    %v438 = vunpack.c.l.b16 %v157
    %v439 = vunpack.c.h.b16 %v157
    %v440 = vunpack.c.l.b16 %v158
    %v441 = vunpack.c.h.b16 %v158
    %v442 = vunpack.c.l.b16 %v159
    %v443 = vunpack.c.h.b16 %v159
    %v444 = vunpack.c.l.b16 %v160
    %v445 = vunpack.c.h.b16 %v160
    %v446 = vunpack.c.l.b16 %v161
    %v447 = vunpack.c.h.b16 %v161
    %v448 = vunpack.c.l.b16 %v162
    %v449 = vunpack.c.h.b16 %v162
    %v450 = vunpack.c.l.b16 %v163
    %v451 = vunpack.c.h.b16 %v163
    %v452 = vunpack.c.l.b16 %v164
    %v453 = vunpack.c.h.b16 %v164
    %v454 = vunpack.c.l.b16 %v165
    %v455 = vunpack.c.h.b16 %v165
    %v456 = vunpack.c.l.b16 %v166
    %v457 = vunpack.c.h.b16 %v166
    %v458 = vunpack.c.l.b16 %v167
    %v459 = vunpack.c.h.b16 %v167
    %v460 = vunpack.c.l.b16 %v168
    %v461 = vunpack.c.h.b16 %v168
    %v462 = vunpack.c.l.b16 %v169
    %v463 = vunpack.c.h.b16 %v169
    %v464 = vunpack.c.l.b16 %v170
    %v465 = vunpack.c.h.b16 %v170
    %v466 = vunpack.c.l.b16 %v171
    %v467 = vunpack.c.h.b16 %v171
    %v468 = vunpack.c.l.b16 %v172
    %v469 = vunpack.c.h.b16 %v172
    %v470 = vunpack.c.l.b16 %v173
    %v471 = vunpack.c.h.b16 %v173
    %v472 = vunpack.c.l.b16 %v174
    %v473 = vunpack.c.h.b16 %v174
    %v474 = vunpack.c.l.b16 %v175
    %v475 = vunpack.c.h.b16 %v175
    %v476 = vpack.c.b16 %v286, %v284
    %v477 = vpack.c.b16 %v287, %v285
    %v478 = vpack.c.b16 %v290, %v288
    %v479 = vpack.c.b16 %v291, %v289
    %v480 = vpack.c.b16 %v294, %v292
    %v481 = vpack.c.b16 %v295, %v293
    %v482 = vpack.c.b16 %v298, %v296
    %v483 = vpack.c.b16 %v299, %v297
    %v484 = vpack.c.b16 %v302, %v300
    %v485 = vpack.c.b16 %v303, %v301
    %v486 = vpack.c.b16 %v306, %v304
    %v487 = vpack.c.b16 %v307, %v305
    %v488 = vpack.c.b16 %v310, %v308
    %v489 = vpack.c.b16 %v311, %v309
    %v490 = vpack.c.b16 %v314, %v312
    %v491 = vpack.c.b16 %v315, %v313
    %v492 = vpack.c.b16 %v318, %v316
    %v493 = vpack.c.b16 %v319, %v317
    %v494 = vpack.c.b16 %v322, %v320
    %v495 = vpack.c.b16 %v323, %v321
    %v496 = vpack.c.b16 %v326, %v324
    %v497 = vpack.c.b16 %v327, %v325
    %v498 = vpack.c.b16 %v330, %v328
    %v499 = vpack.c.b16 %v331, %v329
    %v500 = vpack.c.b16 %v334, %v332
    %v501 = vpack.c.b16 %v335, %v333
    %v502 = vpack.c.b16 %v338, %v336
    %v503 = vpack.c.b16 %v339, %v337
    %v504 = vpack.c.b16 %v342, %v340
    %v505 = vpack.c.b16 %v343, %v341
    %v506 = vpack.c.b16 %v346, %v344
    %v507 = vpack.c.b16 %v347, %v345
    %v508 = vpack.c.b16 %v350, %v348
    %v509 = vpack.c.b16 %v351, %v349
    %v510 = vpack.c.b16 %v354, %v352
    %v511 = vpack.c.b16 %v355, %v353
    %v512 = vpack.c.b16 %v358, %v356
    %v513 = vpack.c.b16 %v359, %v357
    %v514 = vpack.c.b16 %v362, %v360
    %v515 = vpack.c.b16 %v363, %v361
    %v516 = vpack.c.b16 %v366, %v364
    %v517 = vpack.c.b16 %v367, %v365
    %v518 = vpack.c.b16 %v370, %v368
    %v519 = vpack.c.b16 %v371, %v369
    %v520 = vpack.c.b16 %v374, %v372
    %v521 = vpack.c.b16 %v375, %v373
    %v522 = vpack.c.b16 %v378, %v376
    %v523 = vpack.c.b16 %v379, %v377
    %v524 = vpack.c.b16 %v382, %v380
    %v525 = vpack.c.b16 %v383, %v381
    %v526 = vpack.c.b16 %v386, %v384
    %v527 = vpack.c.b16 %v387, %v385
    %v528 = vpack.c.b16 %v390, %v388
    %v529 = vpack.c.b16 %v391, %v389
    %v530 = vpack.c.b16 %v394, %v392
    %v531 = vpack.c.b16 %v395, %v393
    %v532 = vpack.c.b16 %v398, %v396
    %v533 = vpack.c.b16 %v399, %v397
    %v534 = vpack.c.b16 %v402, %v400
    %v535 = vpack.c.b16 %v403, %v401
    %v536 = vpack.c.b16 %v406, %v404
    %v537 = vpack.c.b16 %v407, %v405
    %v538 = vpack.c.b16 %v410, %v408
    %v539 = vpack.c.b16 %v411, %v409
    %v540 = vpack.c.b16 %v414, %v412
    %v541 = vpack.c.b16 %v415, %v413
    %v542 = vpack.c.b16 %v418, %v416
    %v543 = vpack.c.b16 %v419, %v417
    %v544 = vpack.c.b16 %v422, %v420
    %v545 = vpack.c.b16 %v423, %v421
    %v546 = vpack.c.b16 %v426, %v424
    %v547 = vpack.c.b16 %v427, %v425
    %v548 = vpack.c.b16 %v430, %v428
    %v549 = vpack.c.b16 %v431, %v429
    %v550 = vpack.c.b16 %v434, %v432
    %v551 = vpack.c.b16 %v435, %v433
    %v552 = vpack.c.b16 %v438, %v436
    %v553 = vpack.c.b16 %v439, %v437
    %v554 = vpack.c.b16 %v442, %v440
    %v555 = vpack.c.b16 %v443, %v441
    %v556 = vpack.c.b16 %v446, %v444
    %v557 = vpack.c.b16 %v447, %v445
    %v558 = vpack.c.b16 %v450, %v448
    %v559 = vpack.c.b16 %v451, %v449
    %v560 = vpack.c.b16 %v454, %v452
    %v561 = vpack.c.b16 %v455, %v453
    %v562 = vpack.c.b16 %v458, %v456
    %v563 = vpack.c.b16 %v459, %v457
    %v564 = vpack.c.b16 %v462, %v460
    %v565 = vpack.c.b16 %v463, %v461
    %v566 = vpack.c.b16 %v466, %v464
    %v567 = vpack.c.b16 %v467, %v465
    %v568 = vpack.c.b16 %v470, %v468
    %v569 = vpack.c.b16 %v471, %v469
    %v570 = vpack.c.b16 %v474, %v472
    %v571 = vpack.c.b16 %v475, %v473
    %668 = vmatprep.subr.bf16.mxu0 %v491
    %669 = vmatpush1.bf16.msra.mxu0 %v490
    %670 = vmatprep.subr.bf16.mxu0 %v489
    %671 = vmatpush1.bf16.msra.mxu0 %v488
    %672 = vmatprep.subr.bf16.mxu0 %v487
    %673 = vmatpush1.bf16.msra.mxu0 %v486
    %674 = vmatprep.subr.bf16.mxu0 %v485
    %675 = vmatpush1.bf16.msra.mxu0 %v484
    %676 = vmatprep.subr.bf16.mxu0 %v483
    %677 = vmatpush1.bf16.msra.mxu0 %v482
    %678 = vmatprep.subr.bf16.mxu0 %v481
    %679 = vmatpush1.bf16.msra.mxu0 %v480
    %680 = vmatprep.subr.bf16.mxu0 %v479
    %681 = vmatpush1.bf16.msra.mxu0 %v478
    %682 = vmatprep.subr.bf16.mxu0 %v477
    %683 = vmatpush1.bf16.msra.mxu0 %v476
    %684 = vmatprep.subr.bf16.mxu0 %v507
    %685 = vmatpush2.bf16.msra.mxu0 %v506
    %686 = vmatprep.subr.bf16.mxu0 %v505
    %687 = vmatpush2.bf16.msra.mxu0 %v504
    %688 = vmatprep.subr.bf16.mxu0 %v503
    %689 = vmatpush2.bf16.msra.mxu0 %v502
    %690 = vmatprep.subr.bf16.mxu0 %v501
    %691 = vmatpush2.bf16.msra.mxu0 %v500
    %692 = vmatprep.subr.bf16.mxu0 %v499
    %693 = vmatpush2.bf16.msra.mxu0 %v498
    %694 = vmatprep.subr.bf16.mxu0 %v497
    %695 = vmatpush2.bf16.msra.mxu0 %v496
    %696 = vmatprep.subr.bf16.mxu0 %v495
    %697 = vmatpush2.bf16.msra.mxu0 %v494
    %698 = vmatprep.subr.bf16.mxu0 %v493
    %699 = vmatpush2.bf16.msra.mxu0 %v492
    %700 = vmatprep.mubr.bf16.mxu0 %v75
    %701 = vmatmul.mubr.bf16.gmra.mxu0 %v74
    %v702 = vpop.f32.mrf.mxu0
    %v703 = vadd.f32 %v181, %v702
    %v704 = vpop.f32.mrf.mxu0
    %v705 = vadd.f32 %v185, %v704
    %v706 = vpop.f32.mrf.mxu0
    %v707 = vpop.f32.mrf.mxu0
    %708 = vdwg.mxu0
    %709 = vmatprep.subr.bf16.mxu0 %v523
    %710 = vmatpush1.bf16.msra.mxu0 %v522
    %711 = vmatprep.subr.bf16.mxu0 %v521
    %712 = vmatpush1.bf16.msra.mxu0 %v520
    %713 = vmatprep.subr.bf16.mxu0 %v519
    %714 = vmatpush1.bf16.msra.mxu0 %v518
    %715 = vmatprep.subr.bf16.mxu0 %v517
    %716 = vmatpush1.bf16.msra.mxu0 %v516
    %717 = vmatprep.subr.bf16.mxu0 %v515
    %718 = vmatpush1.bf16.msra.mxu0 %v514
    %719 = vmatprep.subr.bf16.mxu0 %v513
    %720 = vmatpush1.bf16.msra.mxu0 %v512
    %721 = vmatprep.subr.bf16.mxu0 %v511
    %722 = vmatpush1.bf16.msra.mxu0 %v510
    %723 = vmatprep.subr.bf16.mxu0 %v509
    %724 = vmatpush1.bf16.msra.mxu0 %v508
    %725 = vmatprep.subr.bf16.mxu0 %v539
    %726 = vmatpush2.bf16.msra.mxu0 %v538
    %727 = vmatprep.subr.bf16.mxu0 %v537
    %728 = vmatpush2.bf16.msra.mxu0 %v536
    %729 = vmatprep.subr.bf16.mxu0 %v535
    %730 = vmatpush2.bf16.msra.mxu0 %v534
    %731 = vmatprep.subr.bf16.mxu0 %v533
    %732 = vmatpush2.bf16.msra.mxu0 %v532
    %733 = vmatprep.subr.bf16.mxu0 %v531
    %734 = vmatpush2.bf16.msra.mxu0 %v530
    %735 = vmatprep.subr.bf16.mxu0 %v529
    %736 = vmatpush2.bf16.msra.mxu0 %v528
    %737 = vmatprep.subr.bf16.mxu0 %v527
    %738 = vmatpush2.bf16.msra.mxu0 %v526
    %739 = vmatprep.subr.bf16.mxu0 %v525
    %740 = vmatpush2.bf16.msra.mxu0 %v524
    %741 = vmatprep.mubr.bf16.mxu0 %v77
    %742 = vmatmul.mubr.bf16.gmra.mxu0 %v76
    %v743 = vpop.f32.mrf.mxu0
    %v744 = vadd.f32 %v703, %v743
    %v745 = vpop.f32.mrf.mxu0
    %v746 = vadd.f32 %v705, %v745
    %v747 = vpop.f32.mrf.mxu0
    %v748 = vpop.f32.mrf.mxu0
    %749 = vdwg.mxu0
    %750 = vmatprep.subr.bf16.mxu0 %v555
    %751 = vmatpush1.bf16.msra.mxu0 %v554
    %752 = vmatprep.subr.bf16.mxu0 %v553
    %753 = vmatpush1.bf16.msra.mxu0 %v552
    %754 = vmatprep.subr.bf16.mxu0 %v551
    %755 = vmatpush1.bf16.msra.mxu0 %v550
    %756 = vmatprep.subr.bf16.mxu0 %v549
    %757 = vmatpush1.bf16.msra.mxu0 %v548
    %758 = vmatprep.subr.bf16.mxu0 %v547
    %759 = vmatpush1.bf16.msra.mxu0 %v546
    %760 = vmatprep.subr.bf16.mxu0 %v545
    %761 = vmatpush1.bf16.msra.mxu0 %v544
    %762 = vmatprep.subr.bf16.mxu0 %v543
    %763 = vmatpush1.bf16.msra.mxu0 %v542
    %764 = vmatprep.subr.bf16.mxu0 %v541
    %765 = vmatpush1.bf16.msra.mxu0 %v540
    %766 = vmatprep.subr.bf16.mxu0 %v571
    %767 = vmatpush2.bf16.msra.mxu0 %v570
    %768 = vmatprep.subr.bf16.mxu0 %v569
    %769 = vmatpush2.bf16.msra.mxu0 %v568
    %770 = vmatprep.subr.bf16.mxu0 %v567
    %771 = vmatpush2.bf16.msra.mxu0 %v566
    %772 = vmatprep.subr.bf16.mxu0 %v565
    %773 = vmatpush2.bf16.msra.mxu0 %v564
    %774 = vmatprep.subr.bf16.mxu0 %v563
    %775 = vmatpush2.bf16.msra.mxu0 %v562
    %776 = vmatprep.subr.bf16.mxu0 %v561
    %777 = vmatpush2.bf16.msra.mxu0 %v560
    %778 = vmatprep.subr.bf16.mxu0 %v559
    %779 = vmatpush2.bf16.msra.mxu0 %v558
    %780 = vmatprep.subr.bf16.mxu0 %v557
    %781 = vmatpush2.bf16.msra.mxu0 %v556
    %782 = vmatprep.mubr.bf16.mxu0 %v79
    %783 = vmatmul.mubr.bf16.gmra.mxu0 %v78
    %v784 = vpop.f32.mrf.mxu0
    %v785 = vadd.f32 %v744, %v784
    %v786 = vpop.f32.mrf.mxu0
    %v787 = vadd.f32 %v746, %v786
    %v788 = vpop.f32.mrf.mxu0
    %v789 = vpop.f32.mrf.mxu0
    %790 = vdwg.mxu0
    %v791 = vmax.f32 %v785, 0.0
    %v792 = vmax.f32 %v787, 0.0
    %v793 = vld [vmem:[%s6] sm:$0xff]
    %v794 = vld [vmem:[%s6 + $0x8] sm:$0xff]
    %v795 = vld [vmem:[%s6 + $0x10] sm:$0xff]
    %v796 = vld [vmem:[%s6 + $0x18] sm:$0xff]
    %v797 = vld [vmem:[%s6 + $0x20] sm:$0xff]
    %v798 = vld [vmem:[%s6 + $0x28] sm:$0xff]
    %v799 = vld [vmem:[%s6 + $0x30] sm:$0xff]
    %v800 = vld [vmem:[%s6 + $0x38] sm:$0xff]
    %v801 = vld [vmem:[%s6 + $0x40] sm:$0xff]
    %v802 = vld [vmem:[%s6 + $0x48] sm:$0xff]
    %v803 = vld [vmem:[%s6 + $0x50] sm:$0xff]
    %v804 = vld [vmem:[%s6 + $0x58] sm:$0xff]
    %v805 = vld [vmem:[%s6 + $0x60] sm:$0xff]
    %v806 = vld [vmem:[%s6 + $0x68] sm:$0xff]
    %v807 = vld [vmem:[%s6 + $0x70] sm:$0xff]
    %v808 = vld [vmem:[%s6 + $0x78] sm:$0xff]
    %v809 = vld [vmem:[%s6 + $0x80] sm:$0xff]
    %v810 = vld [vmem:[%s6 + $0x88] sm:$0xff]
    %v811 = vld [vmem:[%s6 + $0x90] sm:$0xff]
    %v812 = vld [vmem:[%s6 + $0x98] sm:$0xff]
    %v813 = vld [vmem:[%s6 + $0xa0] sm:$0xff]
    %v814 = vld [vmem:[%s6 + $0xa8] sm:$0xff]
    %v815 = vld [vmem:[%s6 + $0xb0] sm:$0xff]
    %v816 = vld [vmem:[%s6 + $0xb8] sm:$0xff]
    %v817 = vld [vmem:[%s6 + $0xc0] sm:$0xff]
    %v818 = vld [vmem:[%s6 + $0xc8] sm:$0xff]
    %v819 = vld [vmem:[%s6 + $0xd0] sm:$0xff]
    %v820 = vld [vmem:[%s6 + $0xd8] sm:$0xff]
    %v821 = vld [vmem:[%s6 + $0xe0] sm:$0xff]
    %v822 = vld [vmem:[%s6 + $0xe8] sm:$0xff]
    %v823 = vld [vmem:[%s6 + $0xf0] sm:$0xff]
    %v824 = vld [vmem:[%s6 + $0xf8] sm:$0xff]
    %v825 = vld [vmem:[%s8 + $0x1] ss:$0 sm:$0xff]
    %826 = vmatprep.subr.mxu0 0.0
    %827 = vmatpush1.msra.mxu0 %v808
    %828 = vmatprep.subr.mxu0 0.0
    %829 = vmatpush1.msra.mxu0 %v807
    %830 = vmatprep.subr.mxu0 0.0
    %831 = vmatpush1.msra.mxu0 %v806
    %832 = vmatprep.subr.mxu0 0.0
    %833 = vmatpush1.msra.mxu0 %v805
    %834 = vmatprep.subr.mxu0 0.0
    %835 = vmatpush1.msra.mxu0 %v804
    %836 = vmatprep.subr.mxu0 0.0
    %837 = vmatpush1.msra.mxu0 %v803
    %838 = vmatprep.subr.mxu0 0.0
    %839 = vmatpush1.msra.mxu0 %v802
    %840 = vmatprep.subr.mxu0 0.0
    %841 = vmatpush1.msra.mxu0 %v801
    %842 = vmatprep.subr.mxu0 0.0
    %843 = vmatpush1.msra.mxu0 %v800
    %844 = vmatprep.subr.mxu0 0.0
    %845 = vmatpush1.msra.mxu0 %v799
    %846 = vmatprep.subr.mxu0 0.0
    %847 = vmatpush1.msra.mxu0 %v798
    %848 = vmatprep.subr.mxu0 0.0
    %849 = vmatpush1.msra.mxu0 %v797
    %850 = vmatprep.subr.mxu0 0.0
    %851 = vmatpush1.msra.mxu0 %v796
    %852 = vmatprep.subr.mxu0 0.0
    %853 = vmatpush1.msra.mxu0 %v795
    %854 = vmatprep.subr.mxu0 0.0
    %855 = vmatpush1.msra.mxu0 %v794
    %856 = vmatprep.subr.mxu0 0.0
    %857 = vmatpush1.msra.mxu0 %v793
    %858 = vmatprep.subr.mxu0 0.0
    %859 = vmatpush2.msra.mxu0 %v824
    %860 = vmatprep.subr.mxu0 0.0
    %861 = vmatpush2.msra.mxu0 %v823
    %862 = vmatprep.subr.mxu0 0.0
    %863 = vmatpush2.msra.mxu0 %v822
    %864 = vmatprep.subr.mxu0 0.0
    %865 = vmatpush2.msra.mxu0 %v821
    %866 = vmatprep.subr.mxu0 0.0
    %867 = vmatpush2.msra.mxu0 %v820
    %868 = vmatprep.subr.mxu0 0.0
    %869 = vmatpush2.msra.mxu0 %v819
    %870 = vmatprep.subr.mxu0 0.0
    %871 = vmatpush2.msra.mxu0 %v818
    %872 = vmatprep.subr.mxu0 0.0
    %873 = vmatpush2.msra.mxu0 %v817
    %874 = vmatprep.subr.mxu0 0.0
    %875 = vmatpush2.msra.mxu0 %v816
    %876 = vmatprep.subr.mxu0 0.0
    %877 = vmatpush2.msra.mxu0 %v815
    %878 = vmatprep.subr.mxu0 0.0
    %879 = vmatpush2.msra.mxu0 %v814
    %880 = vmatprep.subr.mxu0 0.0
    %881 = vmatpush2.msra.mxu0 %v813
    %882 = vmatprep.subr.mxu0 0.0
    %883 = vmatpush2.msra.mxu0 %v812
    %884 = vmatprep.subr.mxu0 0.0
    %885 = vmatpush2.msra.mxu0 %v811
    %886 = vmatprep.subr.mxu0 0.0
    %887 = vmatpush2.msra.mxu0 %v810
    %888 = vmatprep.subr.mxu0 0.0
    %889 = vmatpush2.msra.mxu0 %v809
    %890 = vmatprep.mubr.f32.mxu0 %v792
    %891 = vmatmul.mubr.f32.gmra.mxu0 %v791
    %v892 = vpop.f32.mrf.mxu0
    %v893 = vadd.f32 %v825, %v892
    %v894 = vpop.f32.mrf.mxu0
    %895 = vdwg.mxu0
    %v896 = vmax.f32 %v893, 0.0
    %v897 = vld [vmem:[%s6 + $0x2a8] sm:$0xff]
    %v898 = vld [vmem:[%s6 + $0x2b0] sm:$0xff]
    %v899 = vld [vmem:[%s6 + $0x2b8] sm:$0xff]
    %v900 = vld [vmem:[%s6 + $0x2c0] sm:$0xff]
    %v901 = vld [vmem:[%s8 + $0x2] ss:$0 sm:$0xff]
    %vm902 = vcmask 261120
    %v904 = vsel %vm902, %v896, 0
    %906 = vmatprep.subr.mxu0 0.0
    %907 = vmatpush1.msra.mxu0 0.0
    %908 = vmatprep.subr.mxu0 0.0
    %909 = vmatpush1.msra.mxu0 0.0
    %910 = vmatprep.subr.mxu0 0.0
    %911 = vmatpush1.msra.mxu0 0.0
    %912 = vmatprep.subr.mxu0 0.0
    %913 = vmatpush1.msra.mxu0 0.0
    %914 = vmatprep.subr.mxu0 0.0
    %915 = vmatpush1.msra.mxu0 0.0
    %916 = vmatprep.subr.mxu0 0.0
    %917 = vmatpush1.msra.mxu0 0.0
    %918 = vmatprep.subr.mxu0 0.0
    %919 = vmatpush1.msra.mxu0 0.0
    %920 = vmatprep.subr.mxu0 0.0
    %921 = vmatpush1.msra.mxu0 0.0
    %922 = vmatprep.subr.mxu0 0.0
    %923 = vmatpush1.msra.mxu0 0.0
    %924 = vmatprep.subr.mxu0 0.0
    %925 = vmatpush1.msra.mxu0 0.0
    %926 = vmatprep.subr.mxu0 0.0
    %927 = vmatpush1.msra.mxu0 0.0
    %928 = vmatprep.subr.mxu0 0.0
    %929 = vmatpush1.msra.mxu0 0.0
    %930 = vmatprep.subr.mxu0 0.0
    %931 = vmatpush1.msra.mxu0 %v900
    %932 = vmatprep.subr.mxu0 0.0
    %933 = vmatpush1.msra.mxu0 %v899
    %934 = vmatprep.subr.mxu0 0.0
    %935 = vmatpush1.msra.mxu0 %v898
    %936 = vmatprep.subr.mxu0 0.0
    %937 = vmatpush1.msra.mxu0 %v897
    %938 = vmatprep.subr.mxu0 0.0
    %939 = vmatpush2.msra.mxu0 0.0
    %940 = vmatprep.subr.mxu0 0.0
    %941 = vmatpush2.msra.mxu0 0.0
    %942 = vmatprep.subr.mxu0 0.0
    %943 = vmatpush2.msra.mxu0 0.0
    %944 = vmatprep.subr.mxu0 0.0
    %945 = vmatpush2.msra.mxu0 0.0
    %946 = vmatprep.subr.mxu0 0.0
    %947 = vmatpush2.msra.mxu0 0.0
    %948 = vmatprep.subr.mxu0 0.0
    %949 = vmatpush2.msra.mxu0 0.0
    %950 = vmatprep.subr.mxu0 0.0
    %951 = vmatpush2.msra.mxu0 0.0
    %952 = vmatprep.subr.mxu0 0.0
    %953 = vmatpush2.msra.mxu0 0.0
    %954 = vmatprep.subr.mxu0 0.0
    %955 = vmatpush2.msra.mxu0 0.0
    %956 = vmatprep.subr.mxu0 0.0
    %957 = vmatpush2.msra.mxu0 0.0
    %958 = vmatprep.subr.mxu0 0.0
    %959 = vmatpush2.msra.mxu0 0.0
    %960 = vmatprep.subr.mxu0 0.0
    %961 = vmatpush2.msra.mxu0 0.0
    %962 = vmatprep.subr.mxu0 0.0
    %963 = vmatpush2.msra.mxu0 0.0
    %964 = vmatprep.subr.mxu0 0.0
    %965 = vmatpush2.msra.mxu0 0.0
    %966 = vmatprep.subr.mxu0 0.0
    %967 = vmatpush2.msra.mxu0 0.0
    %968 = vmatprep.subr.mxu0 0.0
    %969 = vmatpush2.msra.mxu0 0.0
    %970 = vmatprep.mubr.f32.mxu0 0.0
    %971 = vmatmul.mubr.f32.gmra.mxu0 %v904
    %v972 = vpop.f32.mrf.mxu0
    %v973 = vadd.f32 %v901, %v972
    %v974 = vpop.f32.mrf.mxu0
    %975 = vdwg.mxu0
    %v976 = vmax.f32 %v973, 0.0
    %v977 = vld [vmem:[#allocation4] sm:$0xff]
    %v978 = vld [vmem:[#allocation4 + $0x8] sm:$0xff]
    %v979 = vld [vmem:[#allocation4 + $0x10] sm:$0xff]
    %v980 = vld [vmem:[#allocation4 + $0x18] sm:$0xff]
    %v981 = vld [vmem:[#allocation4 + $0x20] sm:$0xff]
    %v982 = vld [vmem:[#allocation4 + $0x28] sm:$0xff]
    %v983 = vld [vmem:[#allocation4 + $0x30] sm:$0xff]
    %v984 = vpack.c.bf16 %v977, %v977
    %v985 = vpack.c.bf16 %v978, %v978
    %v986 = vpack.c.bf16 %v979, %v979
    %v987 = vpack.c.bf16 %v980, %v980
    %v988 = vpack.c.bf16 %v981, %v981
    %v989 = vpack.c.bf16 %v982, %v982
    %v990 = vpack.c.bf16 %v983, %v983
    %v991 = vld [vmem:[%s5] sm:$0xff]
    %v992 = vld [vmem:[%s5 + $0x8] sm:$0xff]
    %v993 = vld [vmem:[%s5 + $0x10] sm:$0xff]
    %v994 = vld [vmem:[%s5 + $0x18] sm:$0xff]
    %v995 = vld [vmem:[%s5 + $0x20] sm:$0xff]
    %v996 = vld [vmem:[%s5 + $0x28] sm:$0xff]
    %v997 = vld [vmem:[%s5 + $0x30] sm:$0xff]
    %v998 = vld [vmem:[%s5 + $0x38] sm:$0xff]
    %v999 = vld [vmem:[%s5 + $0x40] sm:$0xff]
    %v1000 = vld [vmem:[%s5 + $0x48] sm:$0xff]
    %v1001 = vld [vmem:[%s5 + $0x50] sm:$0xff]
    %v1002 = vld [vmem:[%s5 + $0x58] sm:$0xff]
    %v1003 = vld [vmem:[%s5 + $0x60] sm:$0xff]
    %v1004 = vld [vmem:[%s5 + $0x68] sm:$0xff]
    %v1005 = vld [vmem:[%s5 + $0x70] sm:$0xff]
    %v1006 = vld [vmem:[%s5 + $0x78] sm:$0xff]
    %v1007 = vld [vmem:[%s5 + $0x80] sm:$0xff]
    %v1008 = vld [vmem:[%s5 + $0x88] sm:$0xff]
    %v1009 = vld [vmem:[%s5 + $0x90] sm:$0xff]
    %v1010 = vld [vmem:[%s5 + $0x98] sm:$0xff]
    %v1011 = vld [vmem:[%s5 + $0xa0] sm:$0xff]
    %v1012 = vld [vmem:[%s5 + $0xa8] sm:$0xff]
    %v1013 = vld [vmem:[%s5 + $0xb0] sm:$0xff]
    %v1014 = vld [vmem:[%s5 + $0xb8] sm:$0xff]
    %v1015 = vld [vmem:[%s5 + $0xc0] sm:$0xff]
    %v1016 = vld [vmem:[%s5 + $0xc8] sm:$0xff]
    %v1017 = vld [vmem:[%s5 + $0xd0] sm:$0xff]
    %v1018 = vld [vmem:[%s5 + $0xd8] sm:$0xff]
    %v1019 = vld [vmem:[%s5 + $0xe0] sm:$0xff]
    %v1020 = vld [vmem:[%s5 + $0xe8] sm:$0xff]
    %v1021 = vld [vmem:[%s5 + $0xf0] sm:$0xff]
    %v1022 = vld [vmem:[%s5 + $0xf8] sm:$0xff]
    %v1023 = vld [vmem:[%s5 + $0x100] sm:$0xff]
    %v1024 = vld [vmem:[%s5 + $0x108] sm:$0xff]
    %v1025 = vld [vmem:[%s5 + $0x110] sm:$0xff]
    %v1026 = vld [vmem:[%s5 + $0x118] sm:$0xff]
    %v1027 = vld [vmem:[%s5 + $0x120] sm:$0xff]
    %v1028 = vld [vmem:[%s5 + $0x128] sm:$0xff]
    %v1029 = vld [vmem:[%s5 + $0x130] sm:$0xff]
    %v1030 = vld [vmem:[%s5 + $0x138] sm:$0xff]
    %v1031 = vld [vmem:[%s5 + $0x140] sm:$0xff]
    %v1032 = vld [vmem:[%s5 + $0x148] sm:$0xff]
    %v1033 = vld [vmem:[%s5 + $0x150] sm:$0xff]
    %v1034 = vld [vmem:[%s5 + $0x158] sm:$0xff]
    %v1035 = vld [vmem:[%s5 + $0x160] sm:$0xff]
    %v1036 = vld [vmem:[%s5 + $0x168] sm:$0xff]
    %v1037 = vld [vmem:[%s5 + $0x170] sm:$0xff]
    %v1038 = vld [vmem:[%s5 + $0x178] sm:$0xff]
    %v1039 = vld [vmem:[%s5 + $0x180] sm:$0xff]
    %v1040 = vld [vmem:[%s5 + $0x188] sm:$0xff]
    %v1041 = vld [vmem:[%s5 + $0x190] sm:$0xff]
    %v1042 = vld [vmem:[%s5 + $0x198] sm:$0xff]
    %v1043 = vld [vmem:[%s5 + $0x1a0] sm:$0xff]
    %v1044 = vld [vmem:[%s5 + $0x1a8] sm:$0xff]
    %v1045 = vld [vmem:[%s5 + $0x1b0] sm:$0xff]
    %v1046 = vld [vmem:[%s5 + $0x1b8] sm:$0xff]
    %v1047 = vld [vmem:[%s5 + $0x1c0] sm:$0xff]
    %v1048 = vld [vmem:[%s5 + $0x1c8] sm:$0xff]
    %v1049 = vld [vmem:[%s5 + $0x1d0] sm:$0xff]
    %v1050 = vld [vmem:[%s5 + $0x1d8] sm:$0xff]
    %v1051 = vld [vmem:[%s5 + $0x1e0] sm:$0xff]
    %v1052 = vld [vmem:[%s5 + $0x1e8] sm:$0xff]
    %v1053 = vld [vmem:[%s5 + $0x1f0] sm:$0xff]
    %v1054 = vld [vmem:[%s5 + $0x1f8] sm:$0xff]
    %v1055 = vld [vmem:[%s5 + $0x200] sm:$0xff]
    %v1056 = vld [vmem:[%s5 + $0x208] sm:$0xff]
    %v1057 = vld [vmem:[%s5 + $0x210] sm:$0xff]
    %v1058 = vld [vmem:[%s5 + $0x218] sm:$0xff]
    %v1059 = vld [vmem:[%s5 + $0x220] sm:$0xff]
    %v1060 = vld [vmem:[%s5 + $0x228] sm:$0xff]
    %v1061 = vld [vmem:[%s5 + $0x230] sm:$0xff]
    %v1062 = vld [vmem:[%s5 + $0x238] sm:$0xff]
    %v1063 = vld [vmem:[%s5 + $0x240] sm:$0xff]
    %v1064 = vld [vmem:[%s5 + $0x248] sm:$0xff]
    %v1065 = vld [vmem:[%s5 + $0x250] sm:$0xff]
    %v1066 = vld [vmem:[%s5 + $0x258] sm:$0xff]
    %v1067 = vld [vmem:[%s5 + $0x260] sm:$0xff]
    %v1068 = vld [vmem:[%s5 + $0x268] sm:$0xff]
    %v1069 = vld [vmem:[%s5 + $0x270] sm:$0xff]
    %v1070 = vld [vmem:[%s5 + $0x278] sm:$0xff]
    %v1071 = vld [vmem:[%s5 + $0x280] sm:$0xff]
    %v1072 = vld [vmem:[%s5 + $0x288] sm:$0xff]
    %v1073 = vld [vmem:[%s5 + $0x290] sm:$0xff]
    %v1074 = vld [vmem:[%s5 + $0x298] sm:$0xff]
    %v1075 = vld [vmem:[%s5 + $0x2a0] sm:$0xff]
    %v1076 = vld [vmem:[%s5 + $0x2a8] sm:$0xff]
    %v1077 = vld [vmem:[%s5 + $0x2b0] sm:$0xff]
    %v1078 = vld [vmem:[%s5 + $0x2b8] sm:$0xff]
    %v1079 = vld [vmem:[%s5 + $0x2c0] sm:$0xff]
    %v1080 = vld [vmem:[%s5 + $0x2c8] sm:$0xff]
    %v1081 = vld [vmem:[%s5 + $0x2d0] sm:$0xff]
    %v1082 = vld [vmem:[%s5 + $0x2d8] sm:$0xff]
    %v1083 = vld [vmem:[%s5 + $0x2e0] sm:$0xff]
    %v1084 = vld [vmem:[%s5 + $0x2e8] sm:$0xff]
    %v1085 = vld [vmem:[%s5 + $0x2f0] sm:$0xff]
    %v1086 = vld [vmem:[%s5 + $0x2f8] sm:$0xff]
    %v1087 = vld [vmem:[%s5 + $0x300] sm:$0xff]
    %v1088 = vld [vmem:[%s5 + $0x308] sm:$0xff]
    %v1089 = vld [vmem:[%s5 + $0x310] sm:$0xff]
    %v1090 = vld [vmem:[%s5 + $0x318] sm:$0xff]
    %v1091 = vld [vmem:[%s5 + $0x320] sm:$0xff]
    %v1092 = vld [vmem:[%s5 + $0x328] sm:$0xff]
    %v1093 = vld [vmem:[%s5 + $0x330] sm:$0xff]
    %v1094 = vld [vmem:[%s5 + $0x338] sm:$0xff]
    %v1095 = vld [vmem:[%s5 + $0x340] sm:$0x77]
    %s1096 = scalar_lea.vmem %s8, 3
    %v1097 = vld [vmem:[%s1096] ss:$8 sm:$0x3]
    %v1099 = vlaneseq
    %v1100 = vshrl.u32 %v1099, 7
    %v1101 = vsub.s32 0, %v1100
    %v1102 = vrot.slane %v1097, %v1101
    %v1103 = vlaneseq
    %v1104 = vshrl.u32 %v1103, 7
    %v1105 = vsub.s32 1, %v1104
    %v1106 = vrot.slane %v1097, %v1105
    %v1214 = vunpack.c.l.b16 %v991
    %v1215 = vunpack.c.h.b16 %v991
    %v1216 = vunpack.c.l.b16 %v992
    %v1217 = vunpack.c.h.b16 %v992
    %v1218 = vunpack.c.l.b16 %v993
    %v1219 = vunpack.c.h.b16 %v993
    %v1220 = vunpack.c.l.b16 %v994
    %v1221 = vunpack.c.h.b16 %v994
    %v1222 = vunpack.c.l.b16 %v995
    %v1223 = vunpack.c.h.b16 %v995
    %v1224 = vunpack.c.l.b16 %v996
    %v1225 = vunpack.c.h.b16 %v996
    %v1226 = vunpack.c.l.b16 %v997
    %v1227 = vunpack.c.h.b16 %v997
    %v1228 = vunpack.c.l.b16 %v998
    %v1229 = vunpack.c.h.b16 %v998
    %v1230 = vunpack.c.l.b16 %v999
    %v1231 = vunpack.c.h.b16 %v999
    %v1232 = vunpack.c.l.b16 %v1000
    %v1233 = vunpack.c.h.b16 %v1000
    %v1234 = vunpack.c.l.b16 %v1001
    %v1235 = vunpack.c.h.b16 %v1001
    %v1236 = vunpack.c.l.b16 %v1002
    %v1237 = vunpack.c.h.b16 %v1002
    %v1238 = vunpack.c.l.b16 %v1003
    %v1239 = vunpack.c.h.b16 %v1003
    %v1240 = vunpack.c.l.b16 %v1004
    %v1241 = vunpack.c.h.b16 %v1004
    %v1242 = vunpack.c.l.b16 %v1005
    %v1243 = vunpack.c.h.b16 %v1005
    %v1244 = vunpack.c.l.b16 %v1006
    %v1245 = vunpack.c.h.b16 %v1006
    %v1246 = vunpack.c.l.b16 %v1007
    %v1247 = vunpack.c.h.b16 %v1007
    %v1248 = vunpack.c.l.b16 %v1008
    %v1249 = vunpack.c.h.b16 %v1008
    %v1250 = vunpack.c.l.b16 %v1009
    %v1251 = vunpack.c.h.b16 %v1009
    %v1252 = vunpack.c.l.b16 %v1010
    %v1253 = vunpack.c.h.b16 %v1010
    %v1254 = vunpack.c.l.b16 %v1011
    %v1255 = vunpack.c.h.b16 %v1011
    %v1256 = vunpack.c.l.b16 %v1012
    %v1257 = vunpack.c.h.b16 %v1012
    %v1258 = vunpack.c.l.b16 %v1013
    %v1259 = vunpack.c.h.b16 %v1013
    %v1260 = vunpack.c.l.b16 %v1014
    %v1261 = vunpack.c.h.b16 %v1014
    %v1262 = vunpack.c.l.b16 %v1015
    %v1263 = vunpack.c.h.b16 %v1015
    %v1264 = vunpack.c.l.b16 %v1016
    %v1265 = vunpack.c.h.b16 %v1016
    %v1266 = vunpack.c.l.b16 %v1017
    %v1267 = vunpack.c.h.b16 %v1017
    %v1268 = vunpack.c.l.b16 %v1018
    %v1269 = vunpack.c.h.b16 %v1018
    %v1270 = vunpack.c.l.b16 %v1019
    %v1271 = vunpack.c.h.b16 %v1019
    %v1272 = vunpack.c.l.b16 %v1020
    %v1273 = vunpack.c.h.b16 %v1020
    %v1274 = vunpack.c.l.b16 %v1021
    %v1275 = vunpack.c.h.b16 %v1021
    %v1276 = vunpack.c.l.b16 %v1022
    %v1277 = vunpack.c.h.b16 %v1022
    %v1278 = vunpack.c.l.b16 %v1023
    %v1279 = vunpack.c.h.b16 %v1023
    %v1280 = vunpack.c.l.b16 %v1024
    %v1281 = vunpack.c.h.b16 %v1024
    %v1282 = vunpack.c.l.b16 %v1025
    %v1283 = vunpack.c.h.b16 %v1025
    %v1284 = vunpack.c.l.b16 %v1026
    %v1285 = vunpack.c.h.b16 %v1026
    %v1286 = vunpack.c.l.b16 %v1027
    %v1287 = vunpack.c.h.b16 %v1027
    %v1288 = vunpack.c.l.b16 %v1028
    %v1289 = vunpack.c.h.b16 %v1028
    %v1290 = vunpack.c.l.b16 %v1029
    %v1291 = vunpack.c.h.b16 %v1029
    %v1292 = vunpack.c.l.b16 %v1030
    %v1293 = vunpack.c.h.b16 %v1030
    %v1294 = vunpack.c.l.b16 %v1031
    %v1295 = vunpack.c.h.b16 %v1031
    %v1296 = vunpack.c.l.b16 %v1032
    %v1297 = vunpack.c.h.b16 %v1032
    %v1298 = vunpack.c.l.b16 %v1033
    %v1299 = vunpack.c.h.b16 %v1033
    %v1300 = vunpack.c.l.b16 %v1034
    %v1301 = vunpack.c.h.b16 %v1034
    %v1302 = vunpack.c.l.b16 %v1035
    %v1303 = vunpack.c.h.b16 %v1035
    %v1304 = vunpack.c.l.b16 %v1036
    %v1305 = vunpack.c.h.b16 %v1036
    %v1306 = vunpack.c.l.b16 %v1037
    %v1307 = vunpack.c.h.b16 %v1037
    %v1308 = vunpack.c.l.b16 %v1038
    %v1309 = vunpack.c.h.b16 %v1038
    %v1310 = vunpack.c.l.b16 %v1039
    %v1311 = vunpack.c.h.b16 %v1039
    %v1312 = vunpack.c.l.b16 %v1040
    %v1313 = vunpack.c.h.b16 %v1040
    %v1314 = vunpack.c.l.b16 %v1041
    %v1315 = vunpack.c.h.b16 %v1041
    %v1316 = vunpack.c.l.b16 %v1042
    %v1317 = vunpack.c.h.b16 %v1042
    %v1318 = vunpack.c.l.b16 %v1043
    %v1319 = vunpack.c.h.b16 %v1043
    %v1320 = vunpack.c.l.b16 %v1044
    %v1321 = vunpack.c.h.b16 %v1044
    %v1322 = vunpack.c.l.b16 %v1045
    %v1323 = vunpack.c.h.b16 %v1045
    %v1324 = vunpack.c.l.b16 %v1046
    %v1325 = vunpack.c.h.b16 %v1046
    %v1326 = vunpack.c.l.b16 %v1047
    %v1327 = vunpack.c.h.b16 %v1047
    %v1328 = vunpack.c.l.b16 %v1048
    %v1329 = vunpack.c.h.b16 %v1048
    %v1330 = vunpack.c.l.b16 %v1049
    %v1331 = vunpack.c.h.b16 %v1049
    %v1332 = vunpack.c.l.b16 %v1050
    %v1333 = vunpack.c.h.b16 %v1050
    %v1334 = vunpack.c.l.b16 %v1051
    %v1335 = vunpack.c.h.b16 %v1051
    %v1336 = vunpack.c.l.b16 %v1052
    %v1337 = vunpack.c.h.b16 %v1052
    %v1338 = vunpack.c.l.b16 %v1053
    %v1339 = vunpack.c.h.b16 %v1053
    %v1340 = vunpack.c.l.b16 %v1054
    %v1341 = vunpack.c.h.b16 %v1054
    %v1342 = vunpack.c.l.b16 %v1055
    %v1343 = vunpack.c.h.b16 %v1055
    %v1344 = vunpack.c.l.b16 %v1056
    %v1345 = vunpack.c.h.b16 %v1056
    %v1346 = vunpack.c.l.b16 %v1057
    %v1347 = vunpack.c.h.b16 %v1057
    %v1348 = vunpack.c.l.b16 %v1058
    %v1349 = vunpack.c.h.b16 %v1058
    %v1350 = vunpack.c.l.b16 %v1059
    %v1351 = vunpack.c.h.b16 %v1059
    %v1352 = vunpack.c.l.b16 %v1060
    %v1353 = vunpack.c.h.b16 %v1060
    %v1354 = vunpack.c.l.b16 %v1061
    %v1355 = vunpack.c.h.b16 %v1061
    %v1356 = vunpack.c.l.b16 %v1062
    %v1357 = vunpack.c.h.b16 %v1062
    %v1358 = vunpack.c.l.b16 %v1063
    %v1359 = vunpack.c.h.b16 %v1063
    %v1360 = vunpack.c.l.b16 %v1064
    %v1361 = vunpack.c.h.b16 %v1064
    %v1362 = vunpack.c.l.b16 %v1065
    %v1363 = vunpack.c.h.b16 %v1065
    %v1364 = vunpack.c.l.b16 %v1066
    %v1365 = vunpack.c.h.b16 %v1066
    %v1366 = vunpack.c.l.b16 %v1067
    %v1367 = vunpack.c.h.b16 %v1067
    %v1368 = vunpack.c.l.b16 %v1068
    %v1369 = vunpack.c.h.b16 %v1068
    %v1370 = vunpack.c.l.b16 %v1069
    %v1371 = vunpack.c.h.b16 %v1069
    %v1372 = vunpack.c.l.b16 %v1070
    %v1373 = vunpack.c.h.b16 %v1070
    %v1374 = vunpack.c.l.b16 %v1071
    %v1375 = vunpack.c.h.b16 %v1071
    %v1376 = vunpack.c.l.b16 %v1072
    %v1377 = vunpack.c.h.b16 %v1072
    %v1378 = vunpack.c.l.b16 %v1073
    %v1379 = vunpack.c.h.b16 %v1073
    %v1380 = vunpack.c.l.b16 %v1074
    %v1381 = vunpack.c.h.b16 %v1074
    %v1382 = vunpack.c.l.b16 %v1075
    %v1383 = vunpack.c.h.b16 %v1075
    %v1384 = vunpack.c.l.b16 %v1076
    %v1385 = vunpack.c.h.b16 %v1076
    %v1386 = vunpack.c.l.b16 %v1077
    %v1387 = vunpack.c.h.b16 %v1077
    %v1388 = vunpack.c.l.b16 %v1078
    %v1389 = vunpack.c.h.b16 %v1078
    %v1390 = vunpack.c.l.b16 %v1079
    %v1391 = vunpack.c.h.b16 %v1079
    %v1392 = vunpack.c.l.b16 %v1080
    %v1393 = vunpack.c.h.b16 %v1080
    %v1394 = vunpack.c.l.b16 %v1081
    %v1395 = vunpack.c.h.b16 %v1081
    %v1396 = vunpack.c.l.b16 %v1082
    %v1397 = vunpack.c.h.b16 %v1082
    %v1398 = vunpack.c.l.b16 %v1083
    %v1399 = vunpack.c.h.b16 %v1083
    %v1400 = vunpack.c.l.b16 %v1084
    %v1401 = vunpack.c.h.b16 %v1084
    %v1402 = vunpack.c.l.b16 %v1085
    %v1403 = vunpack.c.h.b16 %v1085
    %v1404 = vunpack.c.l.b16 %v1086
    %v1405 = vunpack.c.h.b16 %v1086
    %v1406 = vunpack.c.l.b16 %v1087
    %v1407 = vunpack.c.h.b16 %v1087
    %v1408 = vunpack.c.l.b16 %v1088
    %v1409 = vunpack.c.h.b16 %v1088
    %v1410 = vunpack.c.l.b16 %v1089
    %v1411 = vunpack.c.h.b16 %v1089
    %v1412 = vunpack.c.l.b16 %v1090
    %v1413 = vunpack.c.h.b16 %v1090
    %v1414 = vunpack.c.l.b16 %v1091
    %v1415 = vunpack.c.h.b16 %v1091
    %v1416 = vunpack.c.l.b16 %v1092
    %v1417 = vunpack.c.h.b16 %v1092
    %v1418 = vunpack.c.l.b16 %v1093
    %v1419 = vunpack.c.h.b16 %v1093
    %v1420 = vunpack.c.l.b16 %v1094
    %v1421 = vunpack.c.h.b16 %v1094
    %v1422 = vunpack.c.l.b16 %v1095
    %v1423 = vunpack.c.h.b16 %v1095
    %v1424 = vpack.c.b16 %v1216, %v1214
    %v1425 = vpack.c.b16 %v1217, %v1215
    %v1426 = vpack.c.b16 %v1220, %v1218
    %v1427 = vpack.c.b16 %v1221, %v1219
    %v1428 = vpack.c.b16 %v1224, %v1222
    %v1429 = vpack.c.b16 %v1225, %v1223
    %v1430 = vpack.c.b16 %v1228, %v1226
    %v1431 = vpack.c.b16 %v1229, %v1227
    %v1432 = vpack.c.b16 %v1232, %v1230
    %v1433 = vpack.c.b16 %v1233, %v1231
    %v1434 = vpack.c.b16 %v1236, %v1234
    %v1435 = vpack.c.b16 %v1237, %v1235
    %v1436 = vpack.c.b16 %v1240, %v1238
    %v1437 = vpack.c.b16 %v1241, %v1239
    %v1438 = vpack.c.b16 %v1244, %v1242
    %v1439 = vpack.c.b16 %v1245, %v1243
    %v1440 = vpack.c.b16 %v1248, %v1246
    %v1441 = vpack.c.b16 %v1249, %v1247
    %v1442 = vpack.c.b16 %v1252, %v1250
    %v1443 = vpack.c.b16 %v1253, %v1251
    %v1444 = vpack.c.b16 %v1256, %v1254
    %v1445 = vpack.c.b16 %v1257, %v1255
    %v1446 = vpack.c.b16 %v1260, %v1258
    %v1447 = vpack.c.b16 %v1261, %v1259
    %v1448 = vpack.c.b16 %v1264, %v1262
    %v1449 = vpack.c.b16 %v1265, %v1263
    %v1450 = vpack.c.b16 %v1268, %v1266
    %v1451 = vpack.c.b16 %v1269, %v1267
    %v1452 = vpack.c.b16 %v1272, %v1270
    %v1453 = vpack.c.b16 %v1273, %v1271
    %v1454 = vpack.c.b16 %v1276, %v1274
    %v1455 = vpack.c.b16 %v1277, %v1275
    %v1456 = vpack.c.b16 %v1280, %v1278
    %v1457 = vpack.c.b16 %v1281, %v1279
    %v1458 = vpack.c.b16 %v1284, %v1282
    %v1459 = vpack.c.b16 %v1285, %v1283
    %v1460 = vpack.c.b16 %v1288, %v1286
    %v1461 = vpack.c.b16 %v1289, %v1287
    %v1462 = vpack.c.b16 %v1292, %v1290
    %v1463 = vpack.c.b16 %v1293, %v1291
    %v1464 = vpack.c.b16 %v1296, %v1294
    %v1465 = vpack.c.b16 %v1297, %v1295
    %v1466 = vpack.c.b16 %v1300, %v1298
    %v1467 = vpack.c.b16 %v1301, %v1299
    %v1468 = vpack.c.b16 %v1304, %v1302
    %v1469 = vpack.c.b16 %v1305, %v1303
    %v1470 = vpack.c.b16 %v1308, %v1306
    %v1471 = vpack.c.b16 %v1309, %v1307
    %v1472 = vpack.c.b16 %v1312, %v1310
    %v1473 = vpack.c.b16 %v1313, %v1311
    %v1474 = vpack.c.b16 %v1316, %v1314
    %v1475 = vpack.c.b16 %v1317, %v1315
    %v1476 = vpack.c.b16 %v1320, %v1318
    %v1477 = vpack.c.b16 %v1321, %v1319
    %v1478 = vpack.c.b16 %v1324, %v1322
    %v1479 = vpack.c.b16 %v1325, %v1323
    %v1480 = vpack.c.b16 %v1328, %v1326
    %v1481 = vpack.c.b16 %v1329, %v1327
    %v1482 = vpack.c.b16 %v1332, %v1330
    %v1483 = vpack.c.b16 %v1333, %v1331
    %v1484 = vpack.c.b16 %v1336, %v1334
    %v1485 = vpack.c.b16 %v1337, %v1335
    %v1486 = vpack.c.b16 %v1340, %v1338
    %v1487 = vpack.c.b16 %v1341, %v1339
    %v1488 = vpack.c.b16 %v1344, %v1342
    %v1489 = vpack.c.b16 %v1345, %v1343
    %v1490 = vpack.c.b16 %v1348, %v1346
    %v1491 = vpack.c.b16 %v1349, %v1347
    %v1492 = vpack.c.b16 %v1352, %v1350
    %v1493 = vpack.c.b16 %v1353, %v1351
    %v1494 = vpack.c.b16 %v1356, %v1354
    %v1495 = vpack.c.b16 %v1357, %v1355
    %v1496 = vpack.c.b16 %v1360, %v1358
    %v1497 = vpack.c.b16 %v1361, %v1359
    %v1498 = vpack.c.b16 %v1364, %v1362
    %v1499 = vpack.c.b16 %v1365, %v1363
    %v1500 = vpack.c.b16 %v1368, %v1366
    %v1501 = vpack.c.b16 %v1369, %v1367
    %v1502 = vpack.c.b16 %v1372, %v1370
    %v1503 = vpack.c.b16 %v1373, %v1371
    %v1504 = vpack.c.b16 %v1376, %v1374
    %v1505 = vpack.c.b16 %v1377, %v1375
    %v1506 = vpack.c.b16 %v1380, %v1378
    %v1507 = vpack.c.b16 %v1381, %v1379
    %v1508 = vpack.c.b16 %v1384, %v1382
    %v1509 = vpack.c.b16 %v1385, %v1383
    %v1510 = vpack.c.b16 %v1388, %v1386
    %v1511 = vpack.c.b16 %v1389, %v1387
    %v1512 = vpack.c.b16 %v1392, %v1390
    %v1513 = vpack.c.b16 %v1393, %v1391
    %v1514 = vpack.c.b16 %v1396, %v1394
    %v1515 = vpack.c.b16 %v1397, %v1395
    %v1516 = vpack.c.b16 %v1400, %v1398
    %v1517 = vpack.c.b16 %v1401, %v1399
    %v1518 = vpack.c.b16 %v1404, %v1402
    %v1519 = vpack.c.b16 %v1405, %v1403
    %v1520 = vpack.c.b16 %v1408, %v1406
    %v1521 = vpack.c.b16 %v1409, %v1407
    %v1522 = vpack.c.b16 %v1412, %v1410
    %v1523 = vpack.c.b16 %v1413, %v1411
    %v1524 = vpack.c.b16 %v1416, %v1414
    %v1525 = vpack.c.b16 %v1417, %v1415
    %v1526 = vpack.c.b16 %v1420, %v1418
    %v1527 = vpack.c.b16 %v1421, %v1419
    %v1528 = vpack.c.b16 %v1422, %v1422
    %v1529 = vpack.c.b16 %v1423, %v1423
    %vm1634 = vcmask 564224
    %v1636 = vsel %vm1634, %v990, 0
    %vm1638 = vcmask 1041408
    %vm1639 = vcmask 1042432
    %v1640 = vsel %vm1638, 4294967295, 65535
    %v1641 = vsel %vm1639, %v1640, 0
    %v1643 = vand.u32 %v1528, %v1641
    %v1646 = vand.u32 %v1529, %v1641
    %1648 = vmatprep.subr.bf16.mxu0 %v1439
    %1649 = vmatpush1.bf16.msra.mxu0 %v1438
    %1650 = vmatprep.subr.bf16.mxu0 %v1437
    %1651 = vmatpush1.bf16.msra.mxu0 %v1436
    %1652 = vmatprep.subr.bf16.mxu0 %v1435
    %1653 = vmatpush1.bf16.msra.mxu0 %v1434
    %1654 = vmatprep.subr.bf16.mxu0 %v1433
    %1655 = vmatpush1.bf16.msra.mxu0 %v1432
    %1656 = vmatprep.subr.bf16.mxu0 %v1431
    %1657 = vmatpush1.bf16.msra.mxu0 %v1430
    %1658 = vmatprep.subr.bf16.mxu0 %v1429
    %1659 = vmatpush1.bf16.msra.mxu0 %v1428
    %1660 = vmatprep.subr.bf16.mxu0 %v1427
    %1661 = vmatpush1.bf16.msra.mxu0 %v1426
    %1662 = vmatprep.subr.bf16.mxu0 %v1425
    %1663 = vmatpush1.bf16.msra.mxu0 %v1424
    %1664 = vmatprep.subr.bf16.mxu0 %v1455
    %1665 = vmatpush2.bf16.msra.mxu0 %v1454
    %1666 = vmatprep.subr.bf16.mxu0 %v1453
    %1667 = vmatpush2.bf16.msra.mxu0 %v1452
    %1668 = vmatprep.subr.bf16.mxu0 %v1451
    %1669 = vmatpush2.bf16.msra.mxu0 %v1450
    %1670 = vmatprep.subr.bf16.mxu0 %v1449
    %1671 = vmatpush2.bf16.msra.mxu0 %v1448
    %1672 = vmatprep.subr.bf16.mxu0 %v1447
    %1673 = vmatpush2.bf16.msra.mxu0 %v1446
    %1674 = vmatprep.subr.bf16.mxu0 %v1445
    %1675 = vmatpush2.bf16.msra.mxu0 %v1444
    %1676 = vmatprep.subr.bf16.mxu0 %v1443
    %1677 = vmatpush2.bf16.msra.mxu0 %v1442
    %1678 = vmatprep.subr.bf16.mxu0 %v1441
    %1679 = vmatpush2.bf16.msra.mxu0 %v1440
    %1680 = vmatprep.mubr.bf16.mxu0 %v985
    %1681 = vmatmul.mubr.bf16.gmra.mxu0 %v984
    %v1682 = vpop.f32.mrf.mxu0
    %v1683 = vadd.f32 %v1102, %v1682
    %v1684 = vpop.f32.mrf.mxu0
    %v1685 = vadd.f32 %v1106, %v1684
    %v1686 = vpop.f32.mrf.mxu0
    %v1687 = vpop.f32.mrf.mxu0
    %1688 = vdwg.mxu0
    %1689 = vmatprep.subr.bf16.mxu0 %v1471
    %1690 = vmatpush1.bf16.msra.mxu0 %v1470
    %1691 = vmatprep.subr.bf16.mxu0 %v1469
    %1692 = vmatpush1.bf16.msra.mxu0 %v1468
    %1693 = vmatprep.subr.bf16.mxu0 %v1467
    %1694 = vmatpush1.bf16.msra.mxu0 %v1466
    %1695 = vmatprep.subr.bf16.mxu0 %v1465
    %1696 = vmatpush1.bf16.msra.mxu0 %v1464
    %1697 = vmatprep.subr.bf16.mxu0 %v1463
    %1698 = vmatpush1.bf16.msra.mxu0 %v1462
    %1699 = vmatprep.subr.bf16.mxu0 %v1461
    %1700 = vmatpush1.bf16.msra.mxu0 %v1460
    %1701 = vmatprep.subr.bf16.mxu0 %v1459
    %1702 = vmatpush1.bf16.msra.mxu0 %v1458
    %1703 = vmatprep.subr.bf16.mxu0 %v1457
    %1704 = vmatpush1.bf16.msra.mxu0 %v1456
    %1705 = vmatprep.subr.bf16.mxu0 %v1487
    %1706 = vmatpush2.bf16.msra.mxu0 %v1486
    %1707 = vmatprep.subr.bf16.mxu0 %v1485
    %1708 = vmatpush2.bf16.msra.mxu0 %v1484
    %1709 = vmatprep.subr.bf16.mxu0 %v1483
    %1710 = vmatpush2.bf16.msra.mxu0 %v1482
    %1711 = vmatprep.subr.bf16.mxu0 %v1481
    %1712 = vmatpush2.bf16.msra.mxu0 %v1480
    %1713 = vmatprep.subr.bf16.mxu0 %v1479
    %1714 = vmatpush2.bf16.msra.mxu0 %v1478
    %1715 = vmatprep.subr.bf16.mxu0 %v1477
    %1716 = vmatpush2.bf16.msra.mxu0 %v1476
    %1717 = vmatprep.subr.bf16.mxu0 %v1475
    %1718 = vmatpush2.bf16.msra.mxu0 %v1474
    %1719 = vmatprep.subr.bf16.mxu0 %v1473
    %1720 = vmatpush2.bf16.msra.mxu0 %v1472
    %1721 = vmatprep.mubr.bf16.mxu0 %v987
    %1722 = vmatmul.mubr.bf16.gmra.mxu0 %v986
    %v1723 = vpop.f32.mrf.mxu0
    %v1724 = vadd.f32 %v1683, %v1723
    %v1725 = vpop.f32.mrf.mxu0
    %v1726 = vadd.f32 %v1685, %v1725
    %v1727 = vpop.f32.mrf.mxu0
    %v1728 = vpop.f32.mrf.mxu0
    %1729 = vdwg.mxu0
    %1730 = vmatprep.subr.bf16.mxu0 %v1503
    %1731 = vmatpush1.bf16.msra.mxu0 %v1502
    %1732 = vmatprep.subr.bf16.mxu0 %v1501
    %1733 = vmatpush1.bf16.msra.mxu0 %v1500
    %1734 = vmatprep.subr.bf16.mxu0 %v1499
    %1735 = vmatpush1.bf16.msra.mxu0 %v1498
    %1736 = vmatprep.subr.bf16.mxu0 %v1497
    %1737 = vmatpush1.bf16.msra.mxu0 %v1496
    %1738 = vmatprep.subr.bf16.mxu0 %v1495
    %1739 = vmatpush1.bf16.msra.mxu0 %v1494
    %1740 = vmatprep.subr.bf16.mxu0 %v1493
    %1741 = vmatpush1.bf16.msra.mxu0 %v1492
    %1742 = vmatprep.subr.bf16.mxu0 %v1491
    %1743 = vmatpush1.bf16.msra.mxu0 %v1490
    %1744 = vmatprep.subr.bf16.mxu0 %v1489
    %1745 = vmatpush1.bf16.msra.mxu0 %v1488
    %1746 = vmatprep.subr.bf16.mxu0 %v1519
    %1747 = vmatpush2.bf16.msra.mxu0 %v1518
    %1748 = vmatprep.subr.bf16.mxu0 %v1517
    %1749 = vmatpush2.bf16.msra.mxu0 %v1516
    %1750 = vmatprep.subr.bf16.mxu0 %v1515
    %1751 = vmatpush2.bf16.msra.mxu0 %v1514
    %1752 = vmatprep.subr.bf16.mxu0 %v1513
    %1753 = vmatpush2.bf16.msra.mxu0 %v1512
    %1754 = vmatprep.subr.bf16.mxu0 %v1511
    %1755 = vmatpush2.bf16.msra.mxu0 %v1510
    %1756 = vmatprep.subr.bf16.mxu0 %v1509
    %1757 = vmatpush2.bf16.msra.mxu0 %v1508
    %1758 = vmatprep.subr.bf16.mxu0 %v1507
    %1759 = vmatpush2.bf16.msra.mxu0 %v1506
    %1760 = vmatprep.subr.bf16.mxu0 %v1505
    %1761 = vmatpush2.bf16.msra.mxu0 %v1504
    %1762 = vmatprep.mubr.bf16.mxu0 %v989
    %1763 = vmatmul.mubr.bf16.gmra.mxu0 %v988
    %v1764 = vpop.f32.mrf.mxu0
    %v1765 = vadd.f32 %v1724, %v1764
    %v1766 = vpop.f32.mrf.mxu0
    %v1767 = vadd.f32 %v1726, %v1766
    %v1768 = vpop.f32.mrf.mxu0
    %v1769 = vpop.f32.mrf.mxu0
    %1770 = vdwg.mxu0
    %1771 = vmatprep.subr.bf16.mxu0 0
    %1772 = vmatpush1.bf16.msra.mxu0 0
    %1773 = vmatprep.subr.bf16.mxu0 0
    %1774 = vmatpush1.bf16.msra.mxu0 0
    %1775 = vmatprep.subr.bf16.mxu0 0
    %1776 = vmatpush1.bf16.msra.mxu0 0
    %1777 = vmatprep.subr.bf16.mxu0 %v1646
    %1778 = vmatpush1.bf16.msra.mxu0 %v1643
    %1779 = vmatprep.subr.bf16.mxu0 %v1527
    %1780 = vmatpush1.bf16.msra.mxu0 %v1526
    %1781 = vmatprep.subr.bf16.mxu0 %v1525
    %1782 = vmatpush1.bf16.msra.mxu0 %v1524
    %1783 = vmatprep.subr.bf16.mxu0 %v1523
    %1784 = vmatpush1.bf16.msra.mxu0 %v1522
    %1785 = vmatprep.subr.bf16.mxu0 %v1521
    %1786 = vmatpush1.bf16.msra.mxu0 %v1520
    %1787 = vmatprep.subr.bf16.mxu0 0
    %1788 = vmatpush2.bf16.msra.mxu0 0
    %1789 = vmatprep.subr.bf16.mxu0 0
    %1790 = vmatpush2.bf16.msra.mxu0 0
    %1791 = vmatprep.subr.bf16.mxu0 0
    %1792 = vmatpush2.bf16.msra.mxu0 0
    %1793 = vmatprep.subr.bf16.mxu0 0
    %1794 = vmatpush2.bf16.msra.mxu0 0
    %1795 = vmatprep.subr.bf16.mxu0 0
    %1796 = vmatpush2.bf16.msra.mxu0 0
    %1797 = vmatprep.subr.bf16.mxu0 0
    %1798 = vmatpush2.bf16.msra.mxu0 0
    %1799 = vmatprep.subr.bf16.mxu0 0
    %1800 = vmatpush2.bf16.msra.mxu0 0
    %1801 = vmatprep.subr.bf16.mxu0 0
    %1802 = vmatpush2.bf16.msra.mxu0 0
    %1803 = vmatprep.mubr.bf16.mxu0 0
    %1804 = vmatmul.mubr.bf16.gmra.mxu0 %v1636
    %v1805 = vpop.f32.mrf.mxu0
    %v1806 = vadd.f32 %v1765, %v1805
    %v1807 = vpop.f32.mrf.mxu0
    %v1808 = vadd.f32 %v1767, %v1807
    %v1809 = vpop.f32.mrf.mxu0
    %v1810 = vpop.f32.mrf.mxu0
    %1811 = vdwg.mxu0
    %v1812 = vmax.f32 %v1806, 0.0
    %v1813 = vmax.f32 %v1808, 0.0
    %v1814 = vld [vmem:[%s6 + $0x100] sm:$0xff]
    %v1815 = vld [vmem:[%s6 + $0x108] sm:$0xff]
    %v1816 = vld [vmem:[%s6 + $0x110] sm:$0xff]
    %v1817 = vld [vmem:[%s6 + $0x118] sm:$0xff]
    %v1818 = vld [vmem:[%s6 + $0x120] sm:$0xff]
    %v1819 = vld [vmem:[%s6 + $0x128] sm:$0xff]
    %v1820 = vld [vmem:[%s6 + $0x130] sm:$0xff]
    %v1821 = vld [vmem:[%s6 + $0x138] sm:$0xff]
    %v1822 = vld [vmem:[%s6 + $0x140] sm:$0xff]
    %v1823 = vld [vmem:[%s6 + $0x148] sm:$0xff]
    %v1824 = vld [vmem:[%s6 + $0x150] sm:$0xff]
    %v1825 = vld [vmem:[%s6 + $0x158] sm:$0xff]
    %v1826 = vld [vmem:[%s6 + $0x160] sm:$0xff]
    %v1827 = vld [vmem:[%s6 + $0x168] sm:$0xff]
    %v1828 = vld [vmem:[%s6 + $0x170] sm:$0xff]
    %v1829 = vld [vmem:[%s6 + $0x178] sm:$0xff]
    %v1830 = vld [vmem:[%s6 + $0x180] sm:$0xff]
    %v1831 = vld [vmem:[%s6 + $0x188] sm:$0xff]
    %v1832 = vld [vmem:[%s6 + $0x190] sm:$0xff]
    %v1833 = vld [vmem:[%s6 + $0x198] sm:$0xff]
    %v1834 = vld [vmem:[%s6 + $0x1a0] sm:$0xff]
    %v1835 = vld [vmem:[%s6 + $0x1a8] sm:$0xff]
    %v1836 = vld [vmem:[%s6 + $0x1b0] sm:$0xff]
    %v1837 = vld [vmem:[%s6 + $0x1b8] sm:$0xff]
    %v1838 = vld [vmem:[%s6 + $0x1c0] sm:$0xff]
    %v1839 = vld [vmem:[%s6 + $0x1c8] sm:$0xff]
    %v1840 = vld [vmem:[%s6 + $0x1d0] sm:$0xff]
    %v1841 = vld [vmem:[%s6 + $0x1d8] sm:$0xff]
    %v1842 = vld [vmem:[%s6 + $0x1e0] sm:$0xff]
    %v1843 = vld [vmem:[%s6 + $0x1e8] sm:$0xff]
    %v1844 = vld [vmem:[%s6 + $0x1f0] sm:$0xff]
    %v1845 = vld [vmem:[%s6 + $0x1f8] sm:$0xff]
    %v1846 = vld [vmem:[%s8 + $0x4] ss:$0 sm:$0xff]
    %1847 = vmatprep.subr.mxu0 0.0
    %1848 = vmatpush1.msra.mxu0 %v1829
    %1849 = vmatprep.subr.mxu0 0.0
    %1850 = vmatpush1.msra.mxu0 %v1828
    %1851 = vmatprep.subr.mxu0 0.0
    %1852 = vmatpush1.msra.mxu0 %v1827
    %1853 = vmatprep.subr.mxu0 0.0
    %1854 = vmatpush1.msra.mxu0 %v1826
    %1855 = vmatprep.subr.mxu0 0.0
    %1856 = vmatpush1.msra.mxu0 %v1825
    %1857 = vmatprep.subr.mxu0 0.0
    %1858 = vmatpush1.msra.mxu0 %v1824
    %1859 = vmatprep.subr.mxu0 0.0
    %1860 = vmatpush1.msra.mxu0 %v1823
    %1861 = vmatprep.subr.mxu0 0.0
    %1862 = vmatpush1.msra.mxu0 %v1822
    %1863 = vmatprep.subr.mxu0 0.0
    %1864 = vmatpush1.msra.mxu0 %v1821
    %1865 = vmatprep.subr.mxu0 0.0
    %1866 = vmatpush1.msra.mxu0 %v1820
    %1867 = vmatprep.subr.mxu0 0.0
    %1868 = vmatpush1.msra.mxu0 %v1819
    %1869 = vmatprep.subr.mxu0 0.0
    %1870 = vmatpush1.msra.mxu0 %v1818
    %1871 = vmatprep.subr.mxu0 0.0
    %1872 = vmatpush1.msra.mxu0 %v1817
    %1873 = vmatprep.subr.mxu0 0.0
    %1874 = vmatpush1.msra.mxu0 %v1816
    %1875 = vmatprep.subr.mxu0 0.0
    %1876 = vmatpush1.msra.mxu0 %v1815
    %1877 = vmatprep.subr.mxu0 0.0
    %1878 = vmatpush1.msra.mxu0 %v1814
    %1879 = vmatprep.subr.mxu0 0.0
    %1880 = vmatpush2.msra.mxu0 %v1845
    %1881 = vmatprep.subr.mxu0 0.0
    %1882 = vmatpush2.msra.mxu0 %v1844
    %1883 = vmatprep.subr.mxu0 0.0
    %1884 = vmatpush2.msra.mxu0 %v1843
    %1885 = vmatprep.subr.mxu0 0.0
    %1886 = vmatpush2.msra.mxu0 %v1842
    %1887 = vmatprep.subr.mxu0 0.0
    %1888 = vmatpush2.msra.mxu0 %v1841
    %1889 = vmatprep.subr.mxu0 0.0
    %1890 = vmatpush2.msra.mxu0 %v1840
    %1891 = vmatprep.subr.mxu0 0.0
    %1892 = vmatpush2.msra.mxu0 %v1839
    %1893 = vmatprep.subr.mxu0 0.0
    %1894 = vmatpush2.msra.mxu0 %v1838
    %1895 = vmatprep.subr.mxu0 0.0
    %1896 = vmatpush2.msra.mxu0 %v1837
    %1897 = vmatprep.subr.mxu0 0.0
    %1898 = vmatpush2.msra.mxu0 %v1836
    %1899 = vmatprep.subr.mxu0 0.0
    %1900 = vmatpush2.msra.mxu0 %v1835
    %1901 = vmatprep.subr.mxu0 0.0
    %1902 = vmatpush2.msra.mxu0 %v1834
    %1903 = vmatprep.subr.mxu0 0.0
    %1904 = vmatpush2.msra.mxu0 %v1833
    %1905 = vmatprep.subr.mxu0 0.0
    %1906 = vmatpush2.msra.mxu0 %v1832
    %1907 = vmatprep.subr.mxu0 0.0
    %1908 = vmatpush2.msra.mxu0 %v1831
    %1909 = vmatprep.subr.mxu0 0.0
    %1910 = vmatpush2.msra.mxu0 %v1830
    %1911 = vmatprep.mubr.f32.mxu0 %v1813
    %1912 = vmatmul.mubr.f32.gmra.mxu0 %v1812
    %v1913 = vpop.f32.mrf.mxu0
    %v1914 = vadd.f32 %v1846, %v1913
    %v1915 = vpop.f32.mrf.mxu0
    %1916 = vdwg.mxu0
    %v1917 = vmax.f32 %v1914, 0.0
    %v1918 = vld [vmem:[%s2] sm:$0xff]
    %v1919 = vld [vmem:[%s6 + $0x200] sm:$0xff]
    %v1920 = vld [vmem:[%s6 + $0x208] sm:$0xff]
    %v1921 = vld [vmem:[%s6 + $0x210] sm:$0xff]
    %v1922 = vld [vmem:[%s6 + $0x218] sm:$0xff]
    %v1923 = vld [vmem:[%s6 + $0x220] sm:$0xff]
    %v1924 = vld [vmem:[%s6 + $0x228] sm:$0xff]
    %v1925 = vld [vmem:[%s6 + $0x230] sm:$0xff]
    %v1926 = vld [vmem:[%s6 + $0x238] sm:$0xff]
    %v1927 = vld [vmem:[%s6 + $0x240] sm:$0xff]
    %v1928 = vld [vmem:[%s6 + $0x248] sm:$0xff]
    %v1929 = vld [vmem:[%s6 + $0x250] sm:$0xff]
    %v1930 = vld [vmem:[%s6 + $0x258] sm:$0xff]
    %v1931 = vld [vmem:[%s6 + $0x260] sm:$0xff]
    %v1932 = vld [vmem:[%s6 + $0x268] sm:$0xff]
    %v1933 = vld [vmem:[%s6 + $0x270] sm:$0xff]
    %v1934 = vld [vmem:[%s6 + $0x278] sm:$0xff]
    %v1935 = vld [vmem:[%s6 + $0x280] sm:$0xff]
    %v1937 = vsel %vm902, %v1917, 0
    %1939 = vmatprep.subr.mxu0 0.0
    %1940 = vmatpush1.msra.mxu0 0.0
    %1941 = vmatprep.subr.mxu0 0.0
    %1942 = vmatpush1.msra.mxu0 0.0
    %1943 = vmatprep.subr.mxu0 0.0
    %1944 = vmatpush1.msra.mxu0 0.0
    %1945 = vmatprep.subr.mxu0 0.0
    %1946 = vmatpush1.msra.mxu0 0.0
    %1947 = vmatprep.subr.mxu0 0.0
    %1948 = vmatpush1.msra.mxu0 0.0
    %1949 = vmatprep.subr.mxu0 0.0
    %1950 = vmatpush1.msra.mxu0 0.0
    %1951 = vmatprep.subr.mxu0 0.0
    %1952 = vmatpush1.msra.mxu0 0.0
    %1953 = vmatprep.subr.mxu0 0.0
    %1954 = vmatpush1.msra.mxu0 0.0
    %1955 = vmatprep.subr.mxu0 0.0
    %1956 = vmatpush1.msra.mxu0 0.0
    %1957 = vmatprep.subr.mxu0 0.0
    %1958 = vmatpush1.msra.mxu0 0.0
    %1959 = vmatprep.subr.mxu0 0.0
    %1960 = vmatpush1.msra.mxu0 0.0
    %1961 = vmatprep.subr.mxu0 0.0
    %1962 = vmatpush1.msra.mxu0 0.0
    %1963 = vmatprep.subr.mxu0 0.0
    %1964 = vmatpush1.msra.mxu0 %v1935
    %1965 = vmatprep.subr.mxu0 0.0
    %1966 = vmatpush1.msra.mxu0 %v1934
    %1967 = vmatprep.subr.mxu0 0.0
    %1968 = vmatpush1.msra.mxu0 %v1933
    %1969 = vmatprep.subr.mxu0 0.0
    %1970 = vmatpush1.msra.mxu0 %v1932
    %1971 = vmatprep.subr.mxu0 0.0
    %1972 = vmatpush2.msra.mxu0 0.0
    %1973 = vmatprep.subr.mxu0 0.0
    %1974 = vmatpush2.msra.mxu0 0.0
    %1975 = vmatprep.subr.mxu0 0.0
    %1976 = vmatpush2.msra.mxu0 0.0
    %1977 = vmatprep.subr.mxu0 0.0
    %1978 = vmatpush2.msra.mxu0 0.0
    %1979 = vmatprep.subr.mxu0 0.0
    %1980 = vmatpush2.msra.mxu0 0.0
    %1981 = vmatprep.subr.mxu0 0.0
    %1982 = vmatpush2.msra.mxu0 0.0
    %1983 = vmatprep.subr.mxu0 0.0
    %1984 = vmatpush2.msra.mxu0 0.0
    %1985 = vmatprep.subr.mxu0 0.0
    %1986 = vmatpush2.msra.mxu0 0.0
    %1987 = vmatprep.subr.mxu0 0.0
    %1988 = vmatpush2.msra.mxu0 0.0
    %1989 = vmatprep.subr.mxu0 0.0
    %1990 = vmatpush2.msra.mxu0 0.0
    %1991 = vmatprep.subr.mxu0 0.0
    %1992 = vmatpush2.msra.mxu0 0.0
    %1993 = vmatprep.subr.mxu0 0.0
    %1994 = vmatpush2.msra.mxu0 0.0
    %1995 = vmatprep.subr.mxu0 0.0
    %1996 = vmatpush2.msra.mxu0 0.0
    %1997 = vmatprep.subr.mxu0 0.0
    %1998 = vmatpush2.msra.mxu0 0.0
    %1999 = vmatprep.subr.mxu0 0.0
    %2000 = vmatpush2.msra.mxu0 0.0
    %2001 = vmatprep.subr.mxu0 0.0
    %2002 = vmatpush2.msra.mxu0 0.0
    %2003 = vmatprep.mubr.f32.mxu0 0.0
    %2004 = vmatmul.mubr.f32.gmra.mxu0 %v1937
    %v2005 = vpop.f32.mrf.mxu0
    %v2006 = vadd.f32 0.0, %v2005
    %v2007 = vpop.f32.mrf.mxu0
    %2008 = vdwg.mxu0
    %vm2009 = vcmask 850944
    %v2011 = vsel %vm2009, %v1918, 0
    %2013 = vmatprep.subr.mxu0 0.0
    %2014 = vmatpush1.msra.mxu0 0.0
    %2015 = vmatprep.subr.mxu0 0.0
    %2016 = vmatpush1.msra.mxu0 0.0
    %2017 = vmatprep.subr.mxu0 0.0
    %2018 = vmatpush1.msra.mxu0 0.0
    %2019 = vmatprep.subr.mxu0 0.0
    %2020 = vmatpush1.msra.mxu0 %v1931
    %2021 = vmatprep.subr.mxu0 0.0
    %2022 = vmatpush1.msra.mxu0 %v1930
    %2023 = vmatprep.subr.mxu0 0.0
    %2024 = vmatpush1.msra.mxu0 %v1929
    %2025 = vmatprep.subr.mxu0 0.0
    %2026 = vmatpush1.msra.mxu0 %v1928
    %2027 = vmatprep.subr.mxu0 0.0
    %2028 = vmatpush1.msra.mxu0 %v1927
    %2029 = vmatprep.subr.mxu0 0.0
    %2030 = vmatpush1.msra.mxu0 %v1926
    %2031 = vmatprep.subr.mxu0 0.0
    %2032 = vmatpush1.msra.mxu0 %v1925
    %2033 = vmatprep.subr.mxu0 0.0
    %2034 = vmatpush1.msra.mxu0 %v1924
    %2035 = vmatprep.subr.mxu0 0.0
    %2036 = vmatpush1.msra.mxu0 %v1923
    %2037 = vmatprep.subr.mxu0 0.0
    %2038 = vmatpush1.msra.mxu0 %v1922
    %2039 = vmatprep.subr.mxu0 0.0
    %2040 = vmatpush1.msra.mxu0 %v1921
    %2041 = vmatprep.subr.mxu0 0.0
    %2042 = vmatpush1.msra.mxu0 %v1920
    %2043 = vmatprep.subr.mxu0 0.0
    %2044 = vmatpush1.msra.mxu0 %v1919
    %2045 = vmatprep.subr.mxu0 0.0
    %2046 = vmatpush2.msra.mxu0 0.0
    %2047 = vmatprep.subr.mxu0 0.0
    %2048 = vmatpush2.msra.mxu0 0.0
    %2049 = vmatprep.subr.mxu0 0.0
    %2050 = vmatpush2.msra.mxu0 0.0
    %2051 = vmatprep.subr.mxu0 0.0
    %2052 = vmatpush2.msra.mxu0 0.0
    %2053 = vmatprep.subr.mxu0 0.0
    %2054 = vmatpush2.msra.mxu0 0.0
    %2055 = vmatprep.subr.mxu0 0.0
    %2056 = vmatpush2.msra.mxu0 0.0
    %2057 = vmatprep.subr.mxu0 0.0
    %2058 = vmatpush2.msra.mxu0 0.0
    %2059 = vmatprep.subr.mxu0 0.0
    %2060 = vmatpush2.msra.mxu0 0.0
    %2061 = vmatprep.subr.mxu0 0.0
    %2062 = vmatpush2.msra.mxu0 0.0
    %2063 = vmatprep.subr.mxu0 0.0
    %2064 = vmatpush2.msra.mxu0 0.0
    %2065 = vmatprep.subr.mxu0 0.0
    %2066 = vmatpush2.msra.mxu0 0.0
    %2067 = vmatprep.subr.mxu0 0.0
    %2068 = vmatpush2.msra.mxu0 0.0
    %2069 = vmatprep.subr.mxu0 0.0
    %2070 = vmatpush2.msra.mxu0 0.0
    %2071 = vmatprep.subr.mxu0 0.0
    %2072 = vmatpush2.msra.mxu0 0.0
    %2073 = vmatprep.subr.mxu0 0.0
    %2074 = vmatpush2.msra.mxu0 0.0
    %2075 = vmatprep.subr.mxu0 0.0
    %2076 = vmatpush2.msra.mxu0 0.0
    %2077 = vmatprep.mubr.f32.mxu0 0.0
    %2078 = vmatmul.mubr.f32.gmra.mxu0 %v2011
    %v2079 = vpop.f32.mrf.mxu0
    %v2080 = vadd.f32 %v2006, %v2079
    %v2081 = vpop.f32.mrf.mxu0
    %2082 = vdwg.mxu0
    %v2083 = vld [vmem:[%s8 + $0x5] ss:$0 sm:$0xff]
    %v2084 = vadd.f32 %v2080, %v2083
    %v2085 = vmax.f32 %v2084, 0.0
    %v2086 = vld [vmem:[%s7] sm:$0xff]
    %v2087 = vld [vmem:[%s7 + $0x8] sm:$0xff]
    %v2088 = vld [vmem:[%s7 + $0x10] sm:$0xff]
    %v2089 = vld [vmem:[%s7 + $0x18] sm:$0xff]
    %v2090 = vld [vmem:[%s8 + $0x6] ss:$0 sm:$0xff]
    %v2092 = vsel %vm902, %v2085, 0
    %2094 = vmatprep.subr.mxu0 0.0
    %2095 = vmatpush1.msra.mxu0 0.0
    %2096 = vmatprep.subr.mxu0 0.0
    %2097 = vmatpush1.msra.mxu0 0.0
    %2098 = vmatprep.subr.mxu0 0.0
    %2099 = vmatpush1.msra.mxu0 0.0
    %2100 = vmatprep.subr.mxu0 0.0
    %2101 = vmatpush1.msra.mxu0 0.0
    %2102 = vmatprep.subr.mxu0 0.0
    %2103 = vmatpush1.msra.mxu0 0.0
    %2104 = vmatprep.subr.mxu0 0.0
    %2105 = vmatpush1.msra.mxu0 0.0
    %2106 = vmatprep.subr.mxu0 0.0
    %2107 = vmatpush1.msra.mxu0 0.0
    %2108 = vmatprep.subr.mxu0 0.0
    %2109 = vmatpush1.msra.mxu0 0.0
    %2110 = vmatprep.subr.mxu0 0.0
    %2111 = vmatpush1.msra.mxu0 0.0
    %2112 = vmatprep.subr.mxu0 0.0
    %2113 = vmatpush1.msra.mxu0 0.0
    %2114 = vmatprep.subr.mxu0 0.0
    %2115 = vmatpush1.msra.mxu0 0.0
    %2116 = vmatprep.subr.mxu0 0.0
    %2117 = vmatpush1.msra.mxu0 0.0
    %2118 = vmatprep.subr.mxu0 0.0
    %2119 = vmatpush1.msra.mxu0 %v2089
    %2120 = vmatprep.subr.mxu0 0.0
    %2121 = vmatpush1.msra.mxu0 %v2088
    %2122 = vmatprep.subr.mxu0 0.0
    %2123 = vmatpush1.msra.mxu0 %v2087
    %2124 = vmatprep.subr.mxu0 0.0
    %2125 = vmatpush1.msra.mxu0 %v2086
    %2126 = vmatprep.subr.mxu0 0.0
    %2127 = vmatpush2.msra.mxu0 0.0
    %2128 = vmatprep.subr.mxu0 0.0
    %2129 = vmatpush2.msra.mxu0 0.0
    %2130 = vmatprep.subr.mxu0 0.0
    %2131 = vmatpush2.msra.mxu0 0.0
    %2132 = vmatprep.subr.mxu0 0.0
    %2133 = vmatpush2.msra.mxu0 0.0
    %2134 = vmatprep.subr.mxu0 0.0
    %2135 = vmatpush2.msra.mxu0 0.0
    %2136 = vmatprep.subr.mxu0 0.0
    %2137 = vmatpush2.msra.mxu0 0.0
    %2138 = vmatprep.subr.mxu0 0.0
    %2139 = vmatpush2.msra.mxu0 0.0
    %2140 = vmatprep.subr.mxu0 0.0
    %2141 = vmatpush2.msra.mxu0 0.0
    %2142 = vmatprep.subr.mxu0 0.0
    %2143 = vmatpush2.msra.mxu0 0.0
    %2144 = vmatprep.subr.mxu0 0.0
    %2145 = vmatpush2.msra.mxu0 0.0
    %2146 = vmatprep.subr.mxu0 0.0
    %2147 = vmatpush2.msra.mxu0 0.0
    %2148 = vmatprep.subr.mxu0 0.0
    %2149 = vmatpush2.msra.mxu0 0.0
    %2150 = vmatprep.subr.mxu0 0.0
    %2151 = vmatpush2.msra.mxu0 0.0
    %2152 = vmatprep.subr.mxu0 0.0
    %2153 = vmatpush2.msra.mxu0 0.0
    %2154 = vmatprep.subr.mxu0 0.0
    %2155 = vmatpush2.msra.mxu0 0.0
    %2156 = vmatprep.subr.mxu0 0.0
    %2157 = vmatpush2.msra.mxu0 0.0
    %2158 = vmatprep.mubr.f32.mxu0 0.0
    %2159 = vmatmul.mubr.f32.gmra.mxu0 %v2092
    %v2160 = vpop.f32.mrf.mxu0
    %v2161 = vadd.f32 %v2090, %v2160
    %v2162 = vpop.f32.mrf.mxu0
    %2163 = vdwg.mxu0
    %v2164 = vmax.f32 %v2161, 0.0
    %v2165 = vld [vmem:[%s7 + $0x20] sm:$0xff]
    %v2166 = vld [vmem:[%s7 + $0x28] sm:$0xff]
    %v2167 = vld [vmem:[%s7 + $0x30] sm:$0xff]
    %v2168 = vld [vmem:[%s7 + $0x38] sm:$0xff]
    %v2169 = vld [vmem:[%s7 + $0x40] sm:$0xff]
    %v2170 = vld [vmem:[%s7 + $0x48] sm:$0xff]
    %v2171 = vld [vmem:[%s7 + $0x50] sm:$0xff]
    %v2172 = vld [vmem:[%s7 + $0x58] sm:$0xff]
    %v2173 = vld [vmem:[%s8 + $0x7] ss:$0 sm:$0xff]
    %vm2174 = vcmask 523264
    %v2176 = vsel %vm2174, %v2164, 0
    %2178 = vmatprep.subr.mxu0 0.0
    %2179 = vmatpush1.msra.mxu0 0.0
    %2180 = vmatprep.subr.mxu0 0.0
    %2181 = vmatpush1.msra.mxu0 0.0
    %2182 = vmatprep.subr.mxu0 0.0
    %2183 = vmatpush1.msra.mxu0 0.0
    %2184 = vmatprep.subr.mxu0 0.0
    %2185 = vmatpush1.msra.mxu0 0.0
    %2186 = vmatprep.subr.mxu0 0.0
    %2187 = vmatpush1.msra.mxu0 0.0
    %2188 = vmatprep.subr.mxu0 0.0
    %2189 = vmatpush1.msra.mxu0 0.0
    %2190 = vmatprep.subr.mxu0 0.0
    %2191 = vmatpush1.msra.mxu0 0.0
    %2192 = vmatprep.subr.mxu0 0.0
    %2193 = vmatpush1.msra.mxu0 0.0
    %2194 = vmatprep.subr.mxu0 0.0
    %2195 = vmatpush1.msra.mxu0 %v2172
    %2196 = vmatprep.subr.mxu0 0.0
    %2197 = vmatpush1.msra.mxu0 %v2171
    %2198 = vmatprep.subr.mxu0 0.0
    %2199 = vmatpush1.msra.mxu0 %v2170
    %2200 = vmatprep.subr.mxu0 0.0
    %2201 = vmatpush1.msra.mxu0 %v2169
    %2202 = vmatprep.subr.mxu0 0.0
    %2203 = vmatpush1.msra.mxu0 %v2168
    %2204 = vmatprep.subr.mxu0 0.0
    %2205 = vmatpush1.msra.mxu0 %v2167
    %2206 = vmatprep.subr.mxu0 0.0
    %2207 = vmatpush1.msra.mxu0 %v2166
    %2208 = vmatprep.subr.mxu0 0.0
    %2209 = vmatpush1.msra.mxu0 %v2165
    %2210 = vmatprep.subr.mxu0 0.0
    %2211 = vmatpush2.msra.mxu0 0.0
    %2212 = vmatprep.subr.mxu0 0.0
    %2213 = vmatpush2.msra.mxu0 0.0
    %2214 = vmatprep.subr.mxu0 0.0
    %2215 = vmatpush2.msra.mxu0 0.0
    %2216 = vmatprep.subr.mxu0 0.0
    %2217 = vmatpush2.msra.mxu0 0.0
    %2218 = vmatprep.subr.mxu0 0.0
    %2219 = vmatpush2.msra.mxu0 0.0
    %2220 = vmatprep.subr.mxu0 0.0
    %2221 = vmatpush2.msra.mxu0 0.0
    %2222 = vmatprep.subr.mxu0 0.0
    %2223 = vmatpush2.msra.mxu0 0.0
    %2224 = vmatprep.subr.mxu0 0.0
    %2225 = vmatpush2.msra.mxu0 0.0
    %2226 = vmatprep.subr.mxu0 0.0
    %2227 = vmatpush2.msra.mxu0 0.0
    %2228 = vmatprep.subr.mxu0 0.0
    %2229 = vmatpush2.msra.mxu0 0.0
    %2230 = vmatprep.subr.mxu0 0.0
    %2231 = vmatpush2.msra.mxu0 0.0
    %2232 = vmatprep.subr.mxu0 0.0
    %2233 = vmatpush2.msra.mxu0 0.0
    %2234 = vmatprep.subr.mxu0 0.0
    %2235 = vmatpush2.msra.mxu0 0.0
    %2236 = vmatprep.subr.mxu0 0.0
    %2237 = vmatpush2.msra.mxu0 0.0
    %2238 = vmatprep.subr.mxu0 0.0
    %2239 = vmatpush2.msra.mxu0 0.0
    %2240 = vmatprep.subr.mxu0 0.0
    %2241 = vmatpush2.msra.mxu0 0.0
    %2242 = vmatprep.mubr.f32.mxu0 0.0
    %2243 = vmatmul.mubr.f32.gmra.mxu0 %v2176
    %v2244 = vpop.f32.mrf.mxu0
    %v2245 = vadd.f32 %v2173, %v2244
    %v2246 = vpop.f32.mrf.mxu0
    %2247 = vdwg.mxu0
    %v2248 = vld [vmem:[#allocation6] sm:$0xff]
    %v2249 = vld [vmem:[%s6 + $0x288] sm:$0xff]
    %v2250 = vld [vmem:[%s6 + $0x290] sm:$0xff]
    %v2251 = vld [vmem:[%s6 + $0x298] sm:$0xff]
    %v2252 = vld [vmem:[%s6 + $0x2a0] sm:$0xff]
    %v2253 = vld [vmem:[%s6 + $0x2c8] sm:$0xff]
    %v2254 = vld [vmem:[%s6 + $0x2d0] sm:$0xff]
    %v2255 = vld [vmem:[%s6 + $0x2d8] sm:$0xff]
    %v2256 = vld [vmem:[%s6 + $0x2e0] sm:$0xff]
    %v2258 = vsel %vm902, %v976, 0
    %2260 = vmatprep.subr.mxu0 0.0
    %2261 = vmatpush1.msra.mxu0 0.0
    %2262 = vmatprep.subr.mxu0 0.0
    %2263 = vmatpush1.msra.mxu0 0.0
    %2264 = vmatprep.subr.mxu0 0.0
    %2265 = vmatpush1.msra.mxu0 0.0
    %2266 = vmatprep.subr.mxu0 0.0
    %2267 = vmatpush1.msra.mxu0 0.0
    %2268 = vmatprep.subr.mxu0 0.0
    %2269 = vmatpush1.msra.mxu0 0.0
    %2270 = vmatprep.subr.mxu0 0.0
    %2271 = vmatpush1.msra.mxu0 0.0
    %2272 = vmatprep.subr.mxu0 0.0
    %2273 = vmatpush1.msra.mxu0 0.0
    %2274 = vmatprep.subr.mxu0 0.0
    %2275 = vmatpush1.msra.mxu0 0.0
    %2276 = vmatprep.subr.mxu0 0.0
    %2277 = vmatpush1.msra.mxu0 0.0
    %2278 = vmatprep.subr.mxu0 0.0
    %2279 = vmatpush1.msra.mxu0 0.0
    %2280 = vmatprep.subr.mxu0 0.0
    %2281 = vmatpush1.msra.mxu0 0.0
    %2282 = vmatprep.subr.mxu0 0.0
    %2283 = vmatpush1.msra.mxu0 0.0
    %2284 = vmatprep.subr.mxu0 0.0
    %2285 = vmatpush1.msra.mxu0 %v2256
    %2286 = vmatprep.subr.mxu0 0.0
    %2287 = vmatpush1.msra.mxu0 %v2255
    %2288 = vmatprep.subr.mxu0 0.0
    %2289 = vmatpush1.msra.mxu0 %v2254
    %2290 = vmatprep.subr.mxu0 0.0
    %2291 = vmatpush1.msra.mxu0 %v2253
    %2292 = vmatprep.subr.mxu0 0.0
    %2293 = vmatpush2.msra.mxu0 0.0
    %2294 = vmatprep.subr.mxu0 0.0
    %2295 = vmatpush2.msra.mxu0 0.0
    %2296 = vmatprep.subr.mxu0 0.0
    %2297 = vmatpush2.msra.mxu0 0.0
    %2298 = vmatprep.subr.mxu0 0.0
    %2299 = vmatpush2.msra.mxu0 0.0
    %2300 = vmatprep.subr.mxu0 0.0
    %2301 = vmatpush2.msra.mxu0 0.0
    %2302 = vmatprep.subr.mxu0 0.0
    %2303 = vmatpush2.msra.mxu0 0.0
    %2304 = vmatprep.subr.mxu0 0.0
    %2305 = vmatpush2.msra.mxu0 0.0
    %2306 = vmatprep.subr.mxu0 0.0
    %2307 = vmatpush2.msra.mxu0 0.0
    %2308 = vmatprep.subr.mxu0 0.0
    %2309 = vmatpush2.msra.mxu0 0.0
    %2310 = vmatprep.subr.mxu0 0.0
    %2311 = vmatpush2.msra.mxu0 0.0
    %2312 = vmatprep.subr.mxu0 0.0
    %2313 = vmatpush2.msra.mxu0 0.0
    %2314 = vmatprep.subr.mxu0 0.0
    %2315 = vmatpush2.msra.mxu0 0.0
    %2316 = vmatprep.subr.mxu0 0.0
    %2317 = vmatpush2.msra.mxu0 0.0
    %2318 = vmatprep.subr.mxu0 0.0
    %2319 = vmatpush2.msra.mxu0 0.0
    %2320 = vmatprep.subr.mxu0 0.0
    %2321 = vmatpush2.msra.mxu0 0.0
    %2322 = vmatprep.subr.mxu0 0.0
    %2323 = vmatpush2.msra.mxu0 0.0
    %2324 = vmatprep.mubr.f32.mxu0 0.0
    %2325 = vmatmul.mubr.f32.gmra.mxu0 %v2258
    %v2326 = vpop.f32.mrf.mxu0
    %v2327 = vadd.f32 0.0, %v2326
    %v2328 = vpop.f32.mrf.mxu0
    %2329 = vdwg.mxu0
    %v2331 = vsel %vm902, %v2248, 0
    %2333 = vmatprep.subr.mxu0 0.0
    %2334 = vmatpush1.msra.mxu0 0.0
    %2335 = vmatprep.subr.mxu0 0.0
    %2336 = vmatpush1.msra.mxu0 0.0
    %2337 = vmatprep.subr.mxu0 0.0
    %2338 = vmatpush1.msra.mxu0 0.0
    %2339 = vmatprep.subr.mxu0 0.0
    %2340 = vmatpush1.msra.mxu0 0.0
    %2341 = vmatprep.subr.mxu0 0.0
    %2342 = vmatpush1.msra.mxu0 0.0
    %2343 = vmatprep.subr.mxu0 0.0
    %2344 = vmatpush1.msra.mxu0 0.0
    %2345 = vmatprep.subr.mxu0 0.0
    %2346 = vmatpush1.msra.mxu0 0.0
    %2347 = vmatprep.subr.mxu0 0.0
    %2348 = vmatpush1.msra.mxu0 0.0
    %2349 = vmatprep.subr.mxu0 0.0
    %2350 = vmatpush1.msra.mxu0 0.0
    %2351 = vmatprep.subr.mxu0 0.0
    %2352 = vmatpush1.msra.mxu0 0.0
    %2353 = vmatprep.subr.mxu0 0.0
    %2354 = vmatpush1.msra.mxu0 0.0
    %2355 = vmatprep.subr.mxu0 0.0
    %2356 = vmatpush1.msra.mxu0 0.0
    %2357 = vmatprep.subr.mxu0 0.0
    %2358 = vmatpush1.msra.mxu0 %v2252
    %2359 = vmatprep.subr.mxu0 0.0
    %2360 = vmatpush1.msra.mxu0 %v2251
    %2361 = vmatprep.subr.mxu0 0.0
    %2362 = vmatpush1.msra.mxu0 %v2250
    %2363 = vmatprep.subr.mxu0 0.0
    %2364 = vmatpush1.msra.mxu0 %v2249
    %2365 = vmatprep.subr.mxu0 0.0
    %2366 = vmatpush2.msra.mxu0 0.0
    %2367 = vmatprep.subr.mxu0 0.0
    %2368 = vmatpush2.msra.mxu0 0.0
    %2369 = vmatprep.subr.mxu0 0.0
    %2370 = vmatpush2.msra.mxu0 0.0
    %2371 = vmatprep.subr.mxu0 0.0
    %2372 = vmatpush2.msra.mxu0 0.0
    %2373 = vmatprep.subr.mxu0 0.0
    %2374 = vmatpush2.msra.mxu0 0.0
    %2375 = vmatprep.subr.mxu0 0.0
    %2376 = vmatpush2.msra.mxu0 0.0
    %2377 = vmatprep.subr.mxu0 0.0
    %2378 = vmatpush2.msra.mxu0 0.0
    %2379 = vmatprep.subr.mxu0 0.0
    %2380 = vmatpush2.msra.mxu0 0.0
    %2381 = vmatprep.subr.mxu0 0.0
    %2382 = vmatpush2.msra.mxu0 0.0
    %2383 = vmatprep.subr.mxu0 0.0
    %2384 = vmatpush2.msra.mxu0 0.0
    %2385 = vmatprep.subr.mxu0 0.0
    %2386 = vmatpush2.msra.mxu0 0.0
    %2387 = vmatprep.subr.mxu0 0.0
    %2388 = vmatpush2.msra.mxu0 0.0
    %2389 = vmatprep.subr.mxu0 0.0
    %2390 = vmatpush2.msra.mxu0 0.0
    %2391 = vmatprep.subr.mxu0 0.0
    %2392 = vmatpush2.msra.mxu0 0.0
    %2393 = vmatprep.subr.mxu0 0.0
    %2394 = vmatpush2.msra.mxu0 0.0
    %2395 = vmatprep.subr.mxu0 0.0
    %2396 = vmatpush2.msra.mxu0 0.0
    %2397 = vmatprep.mubr.f32.mxu0 0.0
    %2398 = vmatmul.mubr.f32.gmra.mxu0 %v2331
    %v2399 = vpop.f32.mrf.mxu0
    %v2400 = vadd.f32 %v2327, %v2399
    %v2401 = vpop.f32.mrf.mxu0
    %2402 = vdwg.mxu0
    %v2403 = vld [vmem:[%s8 + $0x10] ss:$0 sm:$0xff]
    %v2404 = vadd.f32 %v2400, %v2403
    %v2405 = vmax.f32 %v2404, 0.0
    %v2406 = vld [vmem:[%s7 + $0x60] sm:$0xff]
    %v2407 = vld [vmem:[%s7 + $0x68] sm:$0xff]
    %v2408 = vld [vmem:[%s7 + $0x70] sm:$0xff]
    %v2409 = vld [vmem:[%s7 + $0x78] sm:$0xff]
    %v2410 = vld [vmem:[%s8 + $0x11] ss:$0 sm:$0xff]
    %v2412 = vsel %vm902, %v2405, 0
    %2414 = vmatprep.subr.mxu0 0.0
    %2415 = vmatpush1.msra.mxu0 0.0
    %2416 = vmatprep.subr.mxu0 0.0
    %2417 = vmatpush1.msra.mxu0 0.0
    %2418 = vmatprep.subr.mxu0 0.0
    %2419 = vmatpush1.msra.mxu0 0.0
    %2420 = vmatprep.subr.mxu0 0.0
    %2421 = vmatpush1.msra.mxu0 0.0
    %2422 = vmatprep.subr.mxu0 0.0
    %2423 = vmatpush1.msra.mxu0 0.0
    %2424 = vmatprep.subr.mxu0 0.0
    %2425 = vmatpush1.msra.mxu0 0.0
    %2426 = vmatprep.subr.mxu0 0.0
    %2427 = vmatpush1.msra.mxu0 0.0
    %2428 = vmatprep.subr.mxu0 0.0
    %2429 = vmatpush1.msra.mxu0 0.0
    %2430 = vmatprep.subr.mxu0 0.0
    %2431 = vmatpush1.msra.mxu0 0.0
    %2432 = vmatprep.subr.mxu0 0.0
    %2433 = vmatpush1.msra.mxu0 0.0
    %2434 = vmatprep.subr.mxu0 0.0
    %2435 = vmatpush1.msra.mxu0 0.0
    %2436 = vmatprep.subr.mxu0 0.0
    %2437 = vmatpush1.msra.mxu0 0.0
    %2438 = vmatprep.subr.mxu0 0.0
    %2439 = vmatpush1.msra.mxu0 %v2409
    %2440 = vmatprep.subr.mxu0 0.0
    %2441 = vmatpush1.msra.mxu0 %v2408
    %2442 = vmatprep.subr.mxu0 0.0
    %2443 = vmatpush1.msra.mxu0 %v2407
    %2444 = vmatprep.subr.mxu0 0.0
    %2445 = vmatpush1.msra.mxu0 %v2406
    %2446 = vmatprep.subr.mxu0 0.0
    %2447 = vmatpush2.msra.mxu0 0.0
    %2448 = vmatprep.subr.mxu0 0.0
    %2449 = vmatpush2.msra.mxu0 0.0
    %2450 = vmatprep.subr.mxu0 0.0
    %2451 = vmatpush2.msra.mxu0 0.0
    %2452 = vmatprep.subr.mxu0 0.0
    %2453 = vmatpush2.msra.mxu0 0.0
    %2454 = vmatprep.subr.mxu0 0.0
    %2455 = vmatpush2.msra.mxu0 0.0
    %2456 = vmatprep.subr.mxu0 0.0
    %2457 = vmatpush2.msra.mxu0 0.0
    %2458 = vmatprep.subr.mxu0 0.0
    %2459 = vmatpush2.msra.mxu0 0.0
    %2460 = vmatprep.subr.mxu0 0.0
    %2461 = vmatpush2.msra.mxu0 0.0
    %2462 = vmatprep.subr.mxu0 0.0
    %2463 = vmatpush2.msra.mxu0 0.0
    %2464 = vmatprep.subr.mxu0 0.0
    %2465 = vmatpush2.msra.mxu0 0.0
    %2466 = vmatprep.subr.mxu0 0.0
    %2467 = vmatpush2.msra.mxu0 0.0
    %2468 = vmatprep.subr.mxu0 0.0
    %2469 = vmatpush2.msra.mxu0 0.0
    %2470 = vmatprep.subr.mxu0 0.0
    %2471 = vmatpush2.msra.mxu0 0.0
    %2472 = vmatprep.subr.mxu0 0.0
    %2473 = vmatpush2.msra.mxu0 0.0
    %2474 = vmatprep.subr.mxu0 0.0
    %2475 = vmatpush2.msra.mxu0 0.0
    %2476 = vmatprep.subr.mxu0 0.0
    %2477 = vmatpush2.msra.mxu0 0.0
    %2478 = vmatprep.mubr.f32.mxu0 0.0
    %2479 = vmatmul.mubr.f32.gmra.mxu0 %v2412
    %v2480 = vpop.f32.mrf.mxu0
    %v2481 = vadd.f32 %v2410, %v2480
    %v2482 = vpop.f32.mrf.mxu0
    %2483 = vdwg.mxu0
    %v2484 = vmax.f32 %v2481, 0.0
    %v2485 = vld [vmem:[%s7 + $0x80] sm:$0xff]
    %v2486 = vld [vmem:[%s7 + $0x88] sm:$0xff]
    %v2487 = vld [vmem:[%s7 + $0x90] sm:$0xff]
    %v2488 = vld [vmem:[%s7 + $0x98] sm:$0xff]
    %v2489 = vld [vmem:[%s7 + $0xa0] sm:$0xff]
    %v2490 = vld [vmem:[%s7 + $0xa8] sm:$0xff]
    %v2491 = vld [vmem:[%s7 + $0xb0] sm:$0xff]
    %v2492 = vld [vmem:[%s7 + $0xb8] sm:$0xff]
    %v2493 = vld [vmem:[%s8 + $0x12] ss:$0 sm:$0xff]
    %v2495 = vsel %vm2174, %v2484, 0
    %2497 = vmatprep.subr.mxu0 0.0
    %2498 = vmatpush1.msra.mxu0 0.0
    %2499 = vmatprep.subr.mxu0 0.0
    %2500 = vmatpush1.msra.mxu0 0.0
    %2501 = vmatprep.subr.mxu0 0.0
    %2502 = vmatpush1.msra.mxu0 0.0
    %2503 = vmatprep.subr.mxu0 0.0
    %2504 = vmatpush1.msra.mxu0 0.0
    %2505 = vmatprep.subr.mxu0 0.0
    %2506 = vmatpush1.msra.mxu0 0.0
    %2507 = vmatprep.subr.mxu0 0.0
    %2508 = vmatpush1.msra.mxu0 0.0
    %2509 = vmatprep.subr.mxu0 0.0
    %2510 = vmatpush1.msra.mxu0 0.0
    %2511 = vmatprep.subr.mxu0 0.0
    %2512 = vmatpush1.msra.mxu0 0.0
    %2513 = vmatprep.subr.mxu0 0.0
    %2514 = vmatpush1.msra.mxu0 %v2492
    %2515 = vmatprep.subr.mxu0 0.0
    %2516 = vmatpush1.msra.mxu0 %v2491
    %2517 = vmatprep.subr.mxu0 0.0
    %2518 = vmatpush1.msra.mxu0 %v2490
    %2519 = vmatprep.subr.mxu0 0.0
    %2520 = vmatpush1.msra.mxu0 %v2489
    %2521 = vmatprep.subr.mxu0 0.0
    %2522 = vmatpush1.msra.mxu0 %v2488
    %2523 = vmatprep.subr.mxu0 0.0
    %2524 = vmatpush1.msra.mxu0 %v2487
    %2525 = vmatprep.subr.mxu0 0.0
    %2526 = vmatpush1.msra.mxu0 %v2486
    %2527 = vmatprep.subr.mxu0 0.0
    %2528 = vmatpush1.msra.mxu0 %v2485
    %2529 = vmatprep.subr.mxu0 0.0
    %2530 = vmatpush2.msra.mxu0 0.0
    %2531 = vmatprep.subr.mxu0 0.0
    %2532 = vmatpush2.msra.mxu0 0.0
    %2533 = vmatprep.subr.mxu0 0.0
    %2534 = vmatpush2.msra.mxu0 0.0
    %2535 = vmatprep.subr.mxu0 0.0
    %2536 = vmatpush2.msra.mxu0 0.0
    %2537 = vmatprep.subr.mxu0 0.0
    %2538 = vmatpush2.msra.mxu0 0.0
    %2539 = vmatprep.subr.mxu0 0.0
    %2540 = vmatpush2.msra.mxu0 0.0
    %2541 = vmatprep.subr.mxu0 0.0
    %2542 = vmatpush2.msra.mxu0 0.0
    %2543 = vmatprep.subr.mxu0 0.0
    %2544 = vmatpush2.msra.mxu0 0.0
    %2545 = vmatprep.subr.mxu0 0.0
    %2546 = vmatpush2.msra.mxu0 0.0
    %2547 = vmatprep.subr.mxu0 0.0
    %2548 = vmatpush2.msra.mxu0 0.0
    %2549 = vmatprep.subr.mxu0 0.0
    %2550 = vmatpush2.msra.mxu0 0.0
    %2551 = vmatprep.subr.mxu0 0.0
    %2552 = vmatpush2.msra.mxu0 0.0
    %2553 = vmatprep.subr.mxu0 0.0
    %2554 = vmatpush2.msra.mxu0 0.0
    %2555 = vmatprep.subr.mxu0 0.0
    %2556 = vmatpush2.msra.mxu0 0.0
    %2557 = vmatprep.subr.mxu0 0.0
    %2558 = vmatpush2.msra.mxu0 0.0
    %2559 = vmatprep.subr.mxu0 0.0
    %2560 = vmatpush2.msra.mxu0 0.0
    %2561 = vmatprep.mubr.f32.mxu0 0.0
    %2562 = vmatmul.mubr.f32.gmra.mxu0 %v2495
    %v2563 = vpop.f32.mrf.mxu0
    %v2564 = vadd.f32 %v2493, %v2563
    %v2565 = vpop.f32.mrf.mxu0
    %2566 = vdwg.mxu0
    %v2567 = vld [vmem:[%s7 + $0xc0] sm:$0xff]
    %v2568 = vld [vmem:[%s7 + $0xc8] sm:$0xff]
    %v2569 = vld [vmem:[%s7 + $0xd0] sm:$0xff]
    %v2570 = vld [vmem:[%s7 + $0xd8] sm:$0xff]
    %v2571 = vld [vmem:[%s7 + $0xe0] sm:$0xff]
    %v2572 = vld [vmem:[%s7 + $0xe8] sm:$0xff]
    %v2573 = vld [vmem:[%s7 + $0xf0] sm:$0xff]
    %v2574 = vld [vmem:[%s7 + $0xf8] sm:$0xff]
    %v2575 = vld [vmem:[%s7 + $0x100] sm:$0xff]
    %v2576 = vld [vmem:[%s7 + $0x108] sm:$0xff]
    %v2577 = vld [vmem:[%s7 + $0x110] sm:$0xff]
    %v2578 = vld [vmem:[%s7 + $0x118] sm:$0xff]
    %v2579 = vld [vmem:[%s7 + $0x120] sm:$0xff]
    %v2580 = vld [vmem:[%s7 + $0x128] sm:$0xff]
    %v2581 = vld [vmem:[%s7 + $0x130] sm:$0xff]
    %v2582 = vld [vmem:[%s7 + $0x138] sm:$0xff]
    %v2584 = vsel %vm2174, %v2564, 0
    %2586 = vmatprep.subr.mxu0 0.0
    %2587 = vmatpush1.msra.mxu0 0.0
    %2588 = vmatprep.subr.mxu0 0.0
    %2589 = vmatpush1.msra.mxu0 0.0
    %2590 = vmatprep.subr.mxu0 0.0
    %2591 = vmatpush1.msra.mxu0 0.0
    %2592 = vmatprep.subr.mxu0 0.0
    %2593 = vmatpush1.msra.mxu0 0.0
    %2594 = vmatprep.subr.mxu0 0.0
    %2595 = vmatpush1.msra.mxu0 0.0
    %2596 = vmatprep.subr.mxu0 0.0
    %2597 = vmatpush1.msra.mxu0 0.0
    %2598 = vmatprep.subr.mxu0 0.0
    %2599 = vmatpush1.msra.mxu0 0.0
    %2600 = vmatprep.subr.mxu0 0.0
    %2601 = vmatpush1.msra.mxu0 0.0
    %2602 = vmatprep.subr.mxu0 0.0
    %2603 = vmatpush1.msra.mxu0 %v2582
    %2604 = vmatprep.subr.mxu0 0.0
    %2605 = vmatpush1.msra.mxu0 %v2581
    %2606 = vmatprep.subr.mxu0 0.0
    %2607 = vmatpush1.msra.mxu0 %v2580
    %2608 = vmatprep.subr.mxu0 0.0
    %2609 = vmatpush1.msra.mxu0 %v2579
    %2610 = vmatprep.subr.mxu0 0.0
    %2611 = vmatpush1.msra.mxu0 %v2578
    %2612 = vmatprep.subr.mxu0 0.0
    %2613 = vmatpush1.msra.mxu0 %v2577
    %2614 = vmatprep.subr.mxu0 0.0
    %2615 = vmatpush1.msra.mxu0 %v2576
    %2616 = vmatprep.subr.mxu0 0.0
    %2617 = vmatpush1.msra.mxu0 %v2575
    %2618 = vmatprep.subr.mxu0 0.0
    %2619 = vmatpush2.msra.mxu0 0.0
    %2620 = vmatprep.subr.mxu0 0.0
    %2621 = vmatpush2.msra.mxu0 0.0
    %2622 = vmatprep.subr.mxu0 0.0
    %2623 = vmatpush2.msra.mxu0 0.0
    %2624 = vmatprep.subr.mxu0 0.0
    %2625 = vmatpush2.msra.mxu0 0.0
    %2626 = vmatprep.subr.mxu0 0.0
    %2627 = vmatpush2.msra.mxu0 0.0
    %2628 = vmatprep.subr.mxu0 0.0
    %2629 = vmatpush2.msra.mxu0 0.0
    %2630 = vmatprep.subr.mxu0 0.0
    %2631 = vmatpush2.msra.mxu0 0.0
    %2632 = vmatprep.subr.mxu0 0.0
    %2633 = vmatpush2.msra.mxu0 0.0
    %2634 = vmatprep.subr.mxu0 0.0
    %2635 = vmatpush2.msra.mxu0 0.0
    %2636 = vmatprep.subr.mxu0 0.0
    %2637 = vmatpush2.msra.mxu0 0.0
    %2638 = vmatprep.subr.mxu0 0.0
    %2639 = vmatpush2.msra.mxu0 0.0
    %2640 = vmatprep.subr.mxu0 0.0
    %2641 = vmatpush2.msra.mxu0 0.0
    %2642 = vmatprep.subr.mxu0 0.0
    %2643 = vmatpush2.msra.mxu0 0.0
    %2644 = vmatprep.subr.mxu0 0.0
    %2645 = vmatpush2.msra.mxu0 0.0
    %2646 = vmatprep.subr.mxu0 0.0
    %2647 = vmatpush2.msra.mxu0 0.0
    %2648 = vmatprep.subr.mxu0 0.0
    %2649 = vmatpush2.msra.mxu0 0.0
    %2650 = vmatprep.mubr.f32.mxu0 0.0
    %2651 = vmatmul.mubr.f32.gmra.mxu0 %v2584
    %v2652 = vpop.f32.mrf.mxu0
    %v2653 = vadd.f32 0.0, %v2652
    %v2654 = vpop.f32.mrf.mxu0
    %2655 = vdwg.mxu0
    %v2657 = vsel %vm2174, %v2245, 0
    %2659 = vmatprep.subr.mxu0 0.0
    %2660 = vmatpush1.msra.mxu0 0.0
    %2661 = vmatprep.subr.mxu0 0.0
    %2662 = vmatpush1.msra.mxu0 0.0
    %2663 = vmatprep.subr.mxu0 0.0
    %2664 = vmatpush1.msra.mxu0 0.0
    %2665 = vmatprep.subr.mxu0 0.0
    %2666 = vmatpush1.msra.mxu0 0.0
    %2667 = vmatprep.subr.mxu0 0.0
    %2668 = vmatpush1.msra.mxu0 0.0
    %2669 = vmatprep.subr.mxu0 0.0
    %2670 = vmatpush1.msra.mxu0 0.0
    %2671 = vmatprep.subr.mxu0 0.0
    %2672 = vmatpush1.msra.mxu0 0.0
    %2673 = vmatprep.subr.mxu0 0.0
    %2674 = vmatpush1.msra.mxu0 0.0
    %2675 = vmatprep.subr.mxu0 0.0
    %2676 = vmatpush1.msra.mxu0 %v2574
    %2677 = vmatprep.subr.mxu0 0.0
    %2678 = vmatpush1.msra.mxu0 %v2573
    %2679 = vmatprep.subr.mxu0 0.0
    %2680 = vmatpush1.msra.mxu0 %v2572
    %2681 = vmatprep.subr.mxu0 0.0
    %2682 = vmatpush1.msra.mxu0 %v2571
    %2683 = vmatprep.subr.mxu0 0.0
    %2684 = vmatpush1.msra.mxu0 %v2570
    %2685 = vmatprep.subr.mxu0 0.0
    %2686 = vmatpush1.msra.mxu0 %v2569
    %2687 = vmatprep.subr.mxu0 0.0
    %2688 = vmatpush1.msra.mxu0 %v2568
    %2689 = vmatprep.subr.mxu0 0.0
    %2690 = vmatpush1.msra.mxu0 %v2567
    %2691 = vmatprep.subr.mxu0 0.0
    %2692 = vmatpush2.msra.mxu0 0.0
    %2693 = vmatprep.subr.mxu0 0.0
    %2694 = vmatpush2.msra.mxu0 0.0
    %2695 = vmatprep.subr.mxu0 0.0
    %2696 = vmatpush2.msra.mxu0 0.0
    %2697 = vmatprep.subr.mxu0 0.0
    %2698 = vmatpush2.msra.mxu0 0.0
    %2699 = vmatprep.subr.mxu0 0.0
    %2700 = vmatpush2.msra.mxu0 0.0
    %2701 = vmatprep.subr.mxu0 0.0
    %2702 = vmatpush2.msra.mxu0 0.0
    %2703 = vmatprep.subr.mxu0 0.0
    %2704 = vmatpush2.msra.mxu0 0.0
    %2705 = vmatprep.subr.mxu0 0.0
    %2706 = vmatpush2.msra.mxu0 0.0
    %2707 = vmatprep.subr.mxu0 0.0
    %2708 = vmatpush2.msra.mxu0 0.0
    %2709 = vmatprep.subr.mxu0 0.0
    %2710 = vmatpush2.msra.mxu0 0.0
    %2711 = vmatprep.subr.mxu0 0.0
    %2712 = vmatpush2.msra.mxu0 0.0
    %2713 = vmatprep.subr.mxu0 0.0
    %2714 = vmatpush2.msra.mxu0 0.0
    %2715 = vmatprep.subr.mxu0 0.0
    %2716 = vmatpush2.msra.mxu0 0.0
    %2717 = vmatprep.subr.mxu0 0.0
    %2718 = vmatpush2.msra.mxu0 0.0
    %2719 = vmatprep.subr.mxu0 0.0
    %2720 = vmatpush2.msra.mxu0 0.0
    %2721 = vmatprep.subr.mxu0 0.0
    %2722 = vmatpush2.msra.mxu0 0.0
    %2723 = vmatprep.mubr.f32.mxu0 0.0
    %2724 = vmatmul.mubr.f32.gmra.mxu0 %v2657
    %v2725 = vpop.f32.mrf.mxu0
    %v2726 = vadd.f32 %v2653, %v2725
    %v2727 = vpop.f32.mrf.mxu0
    %2728 = vdwg.mxu0
    %v2729 = vld [vmem:[%s8 + $0x13] ss:$0 sm:$0xff]
    %v2730 = vadd.f32 %v2726, %v2729
    %v2731 = vmax.f32 %v2730, 0.0
    %v2732 = vld [vmem:[%s7 + $0x140] sm:$0xff]
    %v2733 = vld [vmem:[%s7 + $0x148] sm:$0xff]
    %v2734 = vld [vmem:[%s7 + $0x150] sm:$0xff]
    %v2735 = vld [vmem:[%s7 + $0x158] sm:$0xff]
    %v2736 = vld [vmem:[%s7 + $0x160] sm:$0xff]
    %v2737 = vld [vmem:[%s7 + $0x168] sm:$0xff]
    %v2738 = vld [vmem:[%s7 + $0x170] sm:$0xff]
    %v2739 = vld [vmem:[%s7 + $0x178] sm:$0xff]
    %v2740 = vld [vmem:[%s8 + $0x14] ss:$0 sm:$0xff]
    %v2742 = vsel %vm2174, %v2731, 0
    %2744 = vmatprep.subr.mxu0 0.0
    %2745 = vmatpush1.msra.mxu0 0.0
    %2746 = vmatprep.subr.mxu0 0.0
    %2747 = vmatpush1.msra.mxu0 0.0
    %2748 = vmatprep.subr.mxu0 0.0
    %2749 = vmatpush1.msra.mxu0 0.0
    %2750 = vmatprep.subr.mxu0 0.0
    %2751 = vmatpush1.msra.mxu0 0.0
    %2752 = vmatprep.subr.mxu0 0.0
    %2753 = vmatpush1.msra.mxu0 0.0
    %2754 = vmatprep.subr.mxu0 0.0
    %2755 = vmatpush1.msra.mxu0 0.0
    %2756 = vmatprep.subr.mxu0 0.0
    %2757 = vmatpush1.msra.mxu0 0.0
    %2758 = vmatprep.subr.mxu0 0.0
    %2759 = vmatpush1.msra.mxu0 0.0
    %2760 = vmatprep.subr.mxu0 0.0
    %2761 = vmatpush1.msra.mxu0 %v2739
    %2762 = vmatprep.subr.mxu0 0.0
    %2763 = vmatpush1.msra.mxu0 %v2738
    %2764 = vmatprep.subr.mxu0 0.0
    %2765 = vmatpush1.msra.mxu0 %v2737
    %2766 = vmatprep.subr.mxu0 0.0
    %2767 = vmatpush1.msra.mxu0 %v2736
    %2768 = vmatprep.subr.mxu0 0.0
    %2769 = vmatpush1.msra.mxu0 %v2735
    %2770 = vmatprep.subr.mxu0 0.0
    %2771 = vmatpush1.msra.mxu0 %v2734
    %2772 = vmatprep.subr.mxu0 0.0
    %2773 = vmatpush1.msra.mxu0 %v2733
    %2774 = vmatprep.subr.mxu0 0.0
    %2775 = vmatpush1.msra.mxu0 %v2732
    %2776 = vmatprep.subr.mxu0 0.0
    %2777 = vmatpush2.msra.mxu0 0.0
    %2778 = vmatprep.subr.mxu0 0.0
    %2779 = vmatpush2.msra.mxu0 0.0
    %2780 = vmatprep.subr.mxu0 0.0
    %2781 = vmatpush2.msra.mxu0 0.0
    %2782 = vmatprep.subr.mxu0 0.0
    %2783 = vmatpush2.msra.mxu0 0.0
    %2784 = vmatprep.subr.mxu0 0.0
    %2785 = vmatpush2.msra.mxu0 0.0
    %2786 = vmatprep.subr.mxu0 0.0
    %2787 = vmatpush2.msra.mxu0 0.0
    %2788 = vmatprep.subr.mxu0 0.0
    %2789 = vmatpush2.msra.mxu0 0.0
    %2790 = vmatprep.subr.mxu0 0.0
    %2791 = vmatpush2.msra.mxu0 0.0
    %2792 = vmatprep.subr.mxu0 0.0
    %2793 = vmatpush2.msra.mxu0 0.0
    %2794 = vmatprep.subr.mxu0 0.0
    %2795 = vmatpush2.msra.mxu0 0.0
    %2796 = vmatprep.subr.mxu0 0.0
    %2797 = vmatpush2.msra.mxu0 0.0
    %2798 = vmatprep.subr.mxu0 0.0
    %2799 = vmatpush2.msra.mxu0 0.0
    %2800 = vmatprep.subr.mxu0 0.0
    %2801 = vmatpush2.msra.mxu0 0.0
    %2802 = vmatprep.subr.mxu0 0.0
    %2803 = vmatpush2.msra.mxu0 0.0
    %2804 = vmatprep.subr.mxu0 0.0
    %2805 = vmatpush2.msra.mxu0 0.0
    %2806 = vmatprep.subr.mxu0 0.0
    %2807 = vmatpush2.msra.mxu0 0.0
    %2808 = vmatprep.mubr.f32.mxu0 0.0
    %2809 = vmatmul.mubr.f32.gmra.mxu0 %v2742
    %v2810 = vpop.f32.mrf.mxu0
    %v2811 = vadd.f32 %v2740, %v2810
    %v2812 = vpop.f32.mrf.mxu0
    %2813 = vdwg.mxu0
    %v2814 = vmax.f32 %v2811, 0.0
    %v2815 = vld [vmem:[%s7 + $0x180] sm:$0xff]
    %v2816 = vld [vmem:[%s7 + $0x188] sm:$0xff]
    %v2817 = vld [vmem:[%s7 + $0x190] sm:$0xff]
    %v2818 = vld [vmem:[%s7 + $0x198] sm:$0xff]
    %v2819 = vld [vmem:[%s7 + $0x1a0] sm:$0xff]
    %v2820 = vld [vmem:[%s7 + $0x1a8] sm:$0xff]
    %v2821 = vld [vmem:[%s7 + $0x1b0] sm:$0xff]
    %v2822 = vld [vmem:[%s7 + $0x1b8] sm:$0xff]
    %v2823 = vld [vmem:[%s8 + $0x15] ss:$0 sm:$0xff]
    %v2825 = vsel %vm2174, %v2814, 0
    %2827 = vmatprep.subr.mxu0 0.0
    %2828 = vmatpush1.msra.mxu0 0.0
    %2829 = vmatprep.subr.mxu0 0.0
    %2830 = vmatpush1.msra.mxu0 0.0
    %2831 = vmatprep.subr.mxu0 0.0
    %2832 = vmatpush1.msra.mxu0 0.0
    %2833 = vmatprep.subr.mxu0 0.0
    %2834 = vmatpush1.msra.mxu0 0.0
    %2835 = vmatprep.subr.mxu0 0.0
    %2836 = vmatpush1.msra.mxu0 0.0
    %2837 = vmatprep.subr.mxu0 0.0
    %2838 = vmatpush1.msra.mxu0 0.0
    %2839 = vmatprep.subr.mxu0 0.0
    %2840 = vmatpush1.msra.mxu0 0.0
    %2841 = vmatprep.subr.mxu0 0.0
    %2842 = vmatpush1.msra.mxu0 0.0
    %2843 = vmatprep.subr.mxu0 0.0
    %2844 = vmatpush1.msra.mxu0 %v2822
    %2845 = vmatprep.subr.mxu0 0.0
    %2846 = vmatpush1.msra.mxu0 %v2821
    %2847 = vmatprep.subr.mxu0 0.0
    %2848 = vmatpush1.msra.mxu0 %v2820
    %2849 = vmatprep.subr.mxu0 0.0
    %2850 = vmatpush1.msra.mxu0 %v2819
    %2851 = vmatprep.subr.mxu0 0.0
    %2852 = vmatpush1.msra.mxu0 %v2818
    %2853 = vmatprep.subr.mxu0 0.0
    %2854 = vmatpush1.msra.mxu0 %v2817
    %2855 = vmatprep.subr.mxu0 0.0
    %2856 = vmatpush1.msra.mxu0 %v2816
    %2857 = vmatprep.subr.mxu0 0.0
    %2858 = vmatpush1.msra.mxu0 %v2815
    %2859 = vmatprep.subr.mxu0 0.0
    %2860 = vmatpush2.msra.mxu0 0.0
    %2861 = vmatprep.subr.mxu0 0.0
    %2862 = vmatpush2.msra.mxu0 0.0
    %2863 = vmatprep.subr.mxu0 0.0
    %2864 = vmatpush2.msra.mxu0 0.0
    %2865 = vmatprep.subr.mxu0 0.0
    %2866 = vmatpush2.msra.mxu0 0.0
    %2867 = vmatprep.subr.mxu0 0.0
    %2868 = vmatpush2.msra.mxu0 0.0
    %2869 = vmatprep.subr.mxu0 0.0
    %2870 = vmatpush2.msra.mxu0 0.0
    %2871 = vmatprep.subr.mxu0 0.0
    %2872 = vmatpush2.msra.mxu0 0.0
    %2873 = vmatprep.subr.mxu0 0.0
    %2874 = vmatpush2.msra.mxu0 0.0
    %2875 = vmatprep.subr.mxu0 0.0
    %2876 = vmatpush2.msra.mxu0 0.0
    %2877 = vmatprep.subr.mxu0 0.0
    %2878 = vmatpush2.msra.mxu0 0.0
    %2879 = vmatprep.subr.mxu0 0.0
    %2880 = vmatpush2.msra.mxu0 0.0
    %2881 = vmatprep.subr.mxu0 0.0
    %2882 = vmatpush2.msra.mxu0 0.0
    %2883 = vmatprep.subr.mxu0 0.0
    %2884 = vmatpush2.msra.mxu0 0.0
    %2885 = vmatprep.subr.mxu0 0.0
    %2886 = vmatpush2.msra.mxu0 0.0
    %2887 = vmatprep.subr.mxu0 0.0
    %2888 = vmatpush2.msra.mxu0 0.0
    %2889 = vmatprep.subr.mxu0 0.0
    %2890 = vmatpush2.msra.mxu0 0.0
    %2891 = vmatprep.mubr.f32.mxu0 0.0
    %2892 = vmatmul.mubr.f32.gmra.mxu0 %v2825
    %v2893 = vpop.f32.mrf.mxu0
    %v2894 = vadd.f32 %v2823, %v2893
    %v2895 = vpop.f32.mrf.mxu0
    %2896 = vdwg.mxu0
    %v2897 = vxor.u32 %v2894, 2147483648
    %v2898 = vmul.f32 %v2897, 1.442695
    %v2899 = vpow.pop %v2898
    %v2900 = vadd.f32 %v2899, 1.0
    %v2901 = vrcp.pop %v2900
    %v2902 = vmul.f32 1.0, %v2901
    %vm2903 = vcmask 7168
    %2904 = vst.msk [vmem:[%s9] sm:$0xff] %vm2903, %v2902
    // Predicated region
    $region50: #{tpu_custom_call.1} parent=1 // pred_check
      _
    $region51: #{tpu_custom_call.1} parent=1 // pred_check_branch
      %2906 = sbr.rel (0) target = $region53
    $region52: #{tpu_custom_call.1} parent=1 // pred_region
      _
    $region53: #{tpu_custom_call.1} parent=1 // pred_fallthru
      _
    // Predicated region
    $region54: #{tpu_custom_call.1} parent=1 // pred_check
      _
    $region55: #{tpu_custom_call.1} parent=1 // pred_check_branch
      %2908 = sbr.rel (0) target = $region57
    $region56: #{tpu_custom_call.1} parent=1 // pred_region
      _
    $region57: #{tpu_custom_call.1} parent=1 // pred_fallthru
      _
    %2909 = vsyncpa [#allocation3], 1
    %2910 = vsyncpa [#allocation5], 1

</llo_original>
